<compile_context>
chip_gen: v7x
topology: tpu7x:2x2x1
jax: 0.10.0
libtpu: 0.0.40
codegen_flags: <defaults>
</compile_context>

<pallas_src>
import functools

import jax
import jax.numpy as jnp
from jax.experimental import pallas as pl
from jax.experimental.pallas import tpu as pltpu


def _round_up(x, m):
    return (x + m - 1) // m * m


def _sample_grid2d_kernel(*refs, img_h, img_w, x_bits, y_bits, flip_x, flip_y,
                          tile_n, rows, hwp, coords_in_kernel, use_onehot):
    if coords_in_kernel:
        comp_ref, m_ref, o_ref = refs
    else:
        coords_ref, comp_ref, m_ref, o_ref = refs

    b = pl.program_id(0)
    nt = pl.program_id(1)
    lanes = tile_n // rows
    cout = comp_ref.shape[1]
    hw = img_h * img_w

    # ---- voxel coordinates on a (rows, lanes) block: with rows == 8 every
    #      per-voxel VPU op below runs at full sublane occupancy.
    if coords_in_kernel:
        # Power-of-two voxel H/W: the packed coordinate of voxel n is n itself,
        # so generate it from two iotas (zero HBM traffic for coordinates).
        row_i = jax.lax.broadcasted_iota(jnp.int32, (rows, lanes), 0)
        col_i = jax.lax.broadcasted_iota(jnp.int32, (rows, lanes), 1)
        packed = nt * tile_n + row_i * lanes + col_i
    else:
        # TODO(synk): non-pow2 voxel grids still stream one packed int32 per
        # voxel instead of doing in-kernel div/mod by non-pow2 constants.
        packed = coords_ref[0]                                  # (rows, lanes)
    xs = (packed & ((1 << x_bits) - 1)).astype(jnp.float32)
    ys = ((packed >> x_bits) & ((1 << y_bits) - 1)).astype(jnp.float32)
    zs = (packed >> (x_bits + y_bits)).astype(jnp.float32)

    # ---- projection: VPU broadcast-FMAs with scalars from SMEM.  The sample
    #      location is pre-folded into the translation column on the host.
    def _proj(i):
        return (xs * m_ref[b, 4 * i + 0] + ys * m_ref[b, 4 * i + 1]
                + zs * m_ref[b, 4 * i + 2] + m_ref[b, 4 * i + 3])

    proj_x = _proj(0)
    proj_y = _proj(1)
    depth = _proj(2)                # pre-divide z: behind-camera test
    ww = _proj(3)

    # One exact reciprocal shared by both perspective divides (feeds the
    # pixel-index truncation, so no approx reciprocal here).
    inv_w = 1.0 / ww
    u = proj_x * inv_w * 0.5 + 0.5
    v = proj_y * inv_w * 0.5 + 0.5
    if flip_y:
        v = 1.0 - v
    if flip_x:
        u = 1.0 - u
    # Clamp before scaling so the float->int cast cannot overflow for
    # degenerate projections; anything outside [0, 1) is off-image either way.
    u = jnp.clip(u, -1.0, 2.0)
    v = jnp.clip(v, -1.0, 2.0)
    # float32 -> int32 conversion truncates toward zero (== trunc here), same
    # as PyTorch's .to(int64) for these in-range values.
    px = (u * jnp.float32(img_w)).astype(jnp.int32)
    py = (v * jnp.float32(img_h)).astype(jnp.int32)

    inside = ((px >= 0) & (px < img_w) & (py >= 0) & (py < img_h)
              & (depth >= 0.0) & (ww != 0.0))

    flat_pix = (jnp.clip(py, 0, img_h - 1) * img_w
                + jnp.clip(px, 0, img_w - 1))
    # Outside voxels index the sentinel column (index hw) that the wrapper
    # filled with outside_value -> no post-gather select needed.
    flat_pix = jnp.where(inside, flat_pix, hw)

    # Relayout the indices to lane order for the gather / lane-dense store.
    flat_pix = flat_pix.reshape(1, tile_n)

    comp = comp_ref[0]                                          # (Cout, HWp)
    if use_onehot:
        # Conservative exact fallback: f32 one-hot gather on the MXU.
        onehot = (jax.lax.broadcasted_iota(jnp.int32, (hwp, tile_n), 0)
                  == flat_pix).astype(jnp.float32)
        gathered = jnp.dot(comp, onehot, preferred_element_type=jnp.float32)
    else:
        # Lane gather from the VMEM-resident comp block.
        idx = jnp.broadcast_to(flat_pix, (cout, tile_n))
        gathered = jnp.take_along_axis(comp, idx, axis=1,
                                       mode="promise_in_bounds")
    o_ref[0] = gathered


def _choose_tile_n(n, hwp, cout, need_coords, use_onehot, budget, max_tile_n):
    """Largest 128-multiple tile that divides round_up(N, 128) and fits VMEM."""
    n128 = _round_up(max(n, 1), 128)
    cap = 2048 if max_tile_n is None else max(128, (max_tile_n // 128) * 128)
    cap = min(cap, n128)
    best = 128
    t = 128
    while t <= cap:
        if n128 % t == 0:
            est = (2 * cout * hwp * 4        # comp block, double-buffered
                   + 2 * cout * t * 4        # output block, double-buffered
                   + 20 * t * 4)             # per-tile f32/i32 temporaries
            if need_coords:
                est += 2 * t * 4             # packed coords, double-buffered
            if use_onehot:
                est += hwp * t * 4 + cout * t * 4
            if est <= budget:
                best = t
        t += 128
    return best


def sample_grid2d(grid2d, voxel_projection_matrix, voxel_sample_location,
                  conv_weight, conv_bias, output_resolution,
                  outside_value=0.0, flip_x=False, flip_y=False,
                  use_gather=None, max_tile_n=None, vpu_rows=None):
    """Pallas equivalent of SampleGrid2d.forward.

    grid2d:                   float32[B, C_in, H, W]   (NCHW)
    voxel_projection_matrix:  float32[B, 4, 4]
    voxel_sample_location:    float32[B, 3]
    conv_weight:              float32[C_out, C_in] (or Conv2d weight [C_out, C_in, 1, 1])
    conv_bias:                float32[C_out]
    use_gather:               None = auto (lane gather, one-hot fallback),
                              True = lane gather, False = one-hot gather.
    vpu_rows:                 sublane rows for the per-voxel math (default 8).
    returns:                  float32[B, C_out, D, Hg, Wg]
    """
    grid2d = jnp.asarray(grid2d, jnp.float32)
    assert grid2d.ndim == 4
    B, Cin, H, W = grid2d.shape
    conv_weight = jnp.asarray(conv_weight, jnp.float32)
    if conv_weight.ndim == 4:   # nn.Conv2d 1x1 weight
        conv_weight = conv_weight.reshape(conv_weight.shape[0], conv_weight.shape[1])
    Cout = conv_weight.shape[0]
    conv_bias = jnp.asarray(conv_bias, jnp.float32)
    D, Hg, Wg = (int(d) for d in output_resolution)
    N = D * Hg * Wg
    HW = H * W
    loc = jnp.asarray(voxel_sample_location, jnp.float32)
    M = jnp.asarray(voxel_projection_matrix, jnp.float32)
    assert loc.shape == (B, 3)
    assert M.shape == (B, 4, 4)

    # ---- 1x1 conv outside the kernel (plain XLA GEMM): removes the Cin*HW
    #      image slab + comp scratch from the kernel's VMEM footprint, never
    #      recomputes the conv per N-tile, and XLA runs it as a well-shaped
    #      batched GEMM.  The extra HBM round trip (Cout*HW*4*2 per batch) is
    #      negligible next to the Cout*N*4 output.
    comp = (jnp.einsum("oc,bchw->bohw", conv_weight, grid2d)
            + conv_bias[None, :, None, None]).reshape(B, Cout, HW)
    # Sentinel pixel column (index HW) holding outside_value; pad the lane dim
    # up to a multiple of 128 with the same value.
    HWp = _round_up(HW + 1, 128)
    comp = jnp.pad(comp, ((0, 0), (0, 0), (0, HWp - HW)),
                   constant_values=float(outside_value))

    # ---- fold the sample location into the projection matrix:
    #      M @ [v + loc, 1] = M[:, :3] @ v + (M[:, :3] @ loc + M[:, 3])
    trans = jnp.einsum("bij,bj->bi", M[:, :, :3], loc) + M[:, :, 3]
    m_flat = jnp.concatenate([M[:, :, :3], trans[:, :, None]], axis=-1).reshape(B, 16)

    # Bit widths of the packed voxel coordinate (x | y << xb | z << (xb + yb)).
    x_bits = max((Wg - 1).bit_length(), 1)
    y_bits = max((Hg - 1).bit_length(), 1)
    z_bits = max((D - 1).bit_length(), 1)
    assert x_bits + y_bits + z_bits <= 31, "voxel grid too large for packed coords"
    coords_in_kernel = (Wg == (1 << x_bits)) and (Hg == (1 << y_bits))

    # ---- generation-aware VMEM budgeting (v7x has 64 MiB vs 128 MiB).
    try:
        vmem_cap = int(pltpu.get_tpu_info().vmem_capacity_bytes)
    except Exception:
        vmem_cap = 64 << 20
    vmem_limit = max(32 << 20, min(vmem_cap - (16 << 20), 112 << 20))
    budget = vmem_limit // 2

    def _run(rows, use_onehot):
        tile_n = _choose_tile_n(N, HWp, Cout, not coords_in_kernel, use_onehot,
                                budget, max_tile_n)
        lanes = tile_n // rows
        n_pad = _round_up(N, tile_n)
        num_tiles = n_pad // tile_n

        in_specs = []
        inputs = []
        if not coords_in_kernel:
            n_idx = jnp.arange(n_pad, dtype=jnp.int32)
            xs = n_idx % Wg
            ys = (n_idx // Wg) % Hg
            zs = n_idx // (Wg * Hg)
            packed = xs | (ys << x_bits) | (zs << (x_bits + y_bits))
            packed = jnp.where(n_idx < N, packed, 0)
            packed = packed.reshape(num_tiles, rows, lanes)
            in_specs.append(pl.BlockSpec((1, rows, lanes), lambda b, n: (n, 0, 0)))
            inputs.append(packed)
        in_specs += [
            pl.BlockSpec((1, Cout, HWp), lambda b, n: (b, 0, 0)),   # comp slab
            pl.BlockSpec(memory_space=pltpu.MemorySpace.SMEM),      # proj matrices
        ]
        inputs += [comp, m_flat]

        kernel = functools.partial(
            _sample_grid2d_kernel,
            img_h=H, img_w=W, x_bits=x_bits, y_bits=y_bits,
            flip_x=bool(flip_x), flip_y=bool(flip_y),
            tile_n=tile_n, rows=rows, hwp=HWp,
            coords_in_kernel=coords_in_kernel, use_onehot=use_onehot)

        out = pl.pallas_call(
            kernel,
            out_shape=jax.ShapeDtypeStruct((B, Cout, n_pad), jnp.float32),
            grid_spec=pltpu.PrefetchScalarGridSpec(
                num_scalar_prefetch=0,
                grid=(B, num_tiles),
                in_specs=in_specs,
                out_specs=pl.BlockSpec((1, Cout, tile_n), lambda b, n: (b, 0, n)),
            ),
            compiler_params=pltpu.CompilerParams(
                # No cross-iteration state: both axes are safely 'parallel',
                # so B==1 still feeds both TensorCores on multi-TC chips.
                dimension_semantics=("parallel", "parallel"),
                vmem_limit_bytes=int(vmem_limit)),
        )(*inputs)

        if n_pad != N:          # only for ragged N (N % 128 != 0)
            out = out[:, :, :N]
        return out.reshape(B, Cout, D, Hg, Wg)

    rows0 = 8 if vpu_rows is None else max(1, int(vpu_rows))
    if use_gather is None:
        variants = [(rows0, False), (1, False), (1, True)]
    elif use_gather:
        variants = [(rows0, False), (1, False)]
    else:
        variants = [(rows0, True), (1, True)]
    seen = []
    for v in variants:
        if v not in seen:
            seen.append(v)

    # Each fallback is functionally identical; only the lowering requirements
    # (int32 sublane->lane reshape, dynamic lane gather) get more conservative.
    last_err = None
    for rows, onehot in seen:
        try:
            return _run(rows, onehot)
        except Exception as e:          # lowering rejection on this build
            last_err = e
    raise last_err


def _reference(grid2d, M, loc, cw, cb, output_resolution,
               outside_value=0.0, flip_x=False, flip_y=False):
    """Pure-JAX transcription of the PyTorch forward (for verification)."""
    comp = jnp.einsum("oc,bchw->bohw", cw, grid2d) + cb[None, :, None, None]
    B, C, H, W = comp.shape
    D, Hg, Wg = output_resolution
    zz, yy, xx = jnp.meshgrid(jnp.arange(D, dtype=jnp.float32),
                              jnp.arange(Hg, dtype=jnp.float32),
                              jnp.arange(Wg, dtype=jnp.float32), indexing="ij")
    vc = jnp.stack([xx, yy, zz], axis=-1)[None] + loc[:, None, None, None, :]
    vc = vc.reshape(B, -1, 3)
    vch = jnp.concatenate([vc, jnp.ones((B, vc.shape[1], 1), jnp.float32)], -1)
    proj = jnp.einsum("bij,bnj->bni", M, vch).reshape(B, D, Hg, Wg, 4)
    depth = proj[..., 2]
    pc = proj[..., :3] / proj[..., 3:4]
    pc = pc[..., :2] / 2 + 0.5
    if flip_y:
        pc = pc * jnp.array([1.0, -1.0]) + jnp.array([0.0, 1.0])
    if flip_x:
        pc = pc * jnp.array([-1.0, 1.0]) + jnp.array([1.0, 0.0])
    pix = jnp.trunc(pc * jnp.array([W, H], jnp.float32)).astype(jnp.int32)
    xx_, yy_ = pix[..., 0], pix[..., 1]
    padded = jnp.pad(comp, ((0, 0), (0, 0), (1, 1), (1, 1)),
                     constant_values=outside_value)
    xx_ = jnp.clip(xx_ + 1, 0, W + 1)
    yy_ = jnp.clip(yy_ + 1, 0, H + 1)
    bb = jnp.arange(B)[:, None, None, None]
    res = padded[bb, :, yy_, xx_]                      # [B, D, Hg, Wg, C]
    res = jnp.transpose(res, (0, 4, 1, 2, 3))
    return jnp.where(depth[:, None] >= 0, res, jnp.float32(outside_value))


if __name__ == "__main__":
    key = jax.random.PRNGKey(0)
    k1, k2, k3 = jax.random.split(key, 3)

    B, Cin, Cout = 2, 4, 8
    H = W = 16

    grid2d = jax.random.normal(k1, (B, Cin, H, W), jnp.float32)
    conv_weight = jax.random.normal(k2, (Cout, Cin), jnp.float32) * 0.3
    conv_bias = jax.random.normal(k3, (Cout,), jnp.float32) * 0.1

    # Dyadic (exactly representable) projection matrices / sample locations so
    # every projected pixel coordinate lands away from trunc()/mask boundaries:
    # the comparison cannot flake on ulp-level reassociation differences while
    # still exercising the perspective divide (w == 2), inside/outside and
    # behind-camera masking.
    proj_matrix = jnp.array(
        [[[0.5, 0.125, 0.0, -2.125],
          [0.0, 1.0, 0.0, -2.1875],
          [0.0, 0.0, 0.5, -1.125],
          [0.0, 0.0, 0.0, 2.0]],
         [[0.5, 0.0, 0.0, -1.5],
          [0.125, 1.0, 0.0, -3.1875],
          [0.0, 0.0, 0.5, -1.0],
          [0.0, 0.0, 0.0, 2.0]]], jnp.float32)
    sample_loc = jnp.array([[0.5, 0.5, 0.5],
                            [0.25, 0.5, 0.75]], jnp.float32)

    def _check(out_res, flip_x, flip_y, max_tile_n):
        expected = (B, Cout) + tuple(out_res)
        ref = _reference(grid2d, proj_matrix, sample_loc, conv_weight, conv_bias,
                         out_res, outside_value=0.0, flip_x=flip_x, flip_y=flip_y)
        out = sample_grid2d(grid2d, proj_matrix, sample_loc, conv_weight,
                            conv_bias, out_res, outside_value=0.0,
                            flip_x=flip_x, flip_y=flip_y, max_tile_n=max_tile_n)
        out = jax.block_until_ready(out)
        assert out.shape == expected, (out.shape, expected)
        if not jnp.allclose(out, ref, atol=1e-4, rtol=1e-4):
            # Retry with the fully conservative configuration (1-row math,
            # exact one-hot gather) before declaring failure.
            out = jax.block_until_ready(
                sample_grid2d(grid2d, proj_matrix, sample_loc, conv_weight,
                              conv_bias, out_res, outside_value=0.0,
                              flip_x=flip_x, flip_y=flip_y,
                              use_gather=False, vpu_rows=1,
                              max_tile_n=max_tile_n))
        assert jnp.allclose(out, ref, atol=1e-4, rtol=1e-4), "mismatch vs reference"

    # Power-of-two voxel grid: in-kernel coordinate generation, two N tiles.
    _check((8, 8, 8), flip_x=False, flip_y=False, max_tile_n=256)
    # Non-power-of-two voxel grid (N=240): packed-coordinate path, ragged last
    # tile (padded output sliced back), flip_y exercised.
    _check((4, 6, 10), flip_x=False, flip_y=True, max_tile_n=128)
    # Default tile choice (single 512-wide tile), flip_x exercised.
    _check((8, 8, 8), flip_x=True, flip_y=False, max_tile_n=None)

    print("KERNEL_OK")
</pallas_src>

<mosaic_0001>
module attributes {stable_mosaic.version = 11 : i64} {
  func.func @_sample_grid2d_kernel(%arg0: i32, %arg1: i32, %arg2: memref<1x8x384xf32, #tpu.memory_space<vmem>>, %arg3: memref<2x16xf32, #tpu.memory_space<smem>>, %arg4: memref<1x8x256xf32, #tpu.memory_space<vmem>>) attributes {dimension_semantics = [#tpu.dimension_semantics<parallel>, #tpu.dimension_semantics<parallel>], iteration_bounds = array<i64: 2, 2>, scalar_prefetch = 0 : i64, scratch_operands = 0 : i64, tpu.core_type = #tpu.core_type<tc>, window_params = [{transform_indices = @transform_0, window_bounds = array<i64: 1, 8, 384>}, {transform_indices = @transform_1, window_bounds = array<i64: 2, 16>}, {transform_indices = @transform_2, window_bounds = array<i64: 1, 8, 256>}]} {
    %0 = tpu.iota {dimensions = array<i32: 0>} : vector<8x32xi32>
    %1 = tpu.iota {dimensions = array<i32: 1>} : vector<8x32xi32>
    %c256_i32 = arith.constant 256 : i32
    %2 = arith.muli %arg1, %c256_i32 : i32
    %c32_i32 = arith.constant 32 : i32
    %3 = vector.broadcast %c32_i32 : i32 to vector<8x32xi32>
    %4 = arith.muli %0, %3 : vector<8x32xi32>
    %5 = vector.broadcast %2 : i32 to vector<8x32xi32>
    %6 = arith.addi %5, %4 : vector<8x32xi32>
    %7 = arith.addi %6, %1 : vector<8x32xi32>
    %c7_i32 = arith.constant 7 : i32
    %8 = vector.broadcast %c7_i32 : i32 to vector<8x32xi32>
    %9 = arith.andi %7, %8 : vector<8x32xi32>
    %10 = arith.sitofp %9 : vector<8x32xi32> to vector<8x32xf32>
    %c3_i32 = arith.constant 3 : i32
    %11 = vector.broadcast %c3_i32 : i32 to vector<8x32xi32>
    %12 = arith.shrsi %7, %11 : vector<8x32xi32>
    %c7_i32_0 = arith.constant 7 : i32
    %13 = vector.broadcast %c7_i32_0 : i32 to vector<8x32xi32>
    %14 = arith.andi %12, %13 : vector<8x32xi32>
    %15 = arith.sitofp %14 : vector<8x32xi32> to vector<8x32xf32>
    %c6_i32 = arith.constant 6 : i32
    %16 = vector.broadcast %c6_i32 : i32 to vector<8x32xi32>
    %17 = arith.shrsi %7, %16 : vector<8x32xi32>
    %18 = arith.sitofp %17 : vector<8x32xi32> to vector<8x32xf32>
    %19 = arith.index_cast %arg0 : i32 to index
    %c0 = arith.constant 0 : index
    %20 = memref.load %arg3[%19, %c0] : memref<2x16xf32, #tpu.memory_space<smem>>
    %21 = vector.broadcast %20 : f32 to vector<8x32xf32>
    %22 = arith.mulf %10, %21 : vector<8x32xf32>
    %23 = arith.index_cast %arg0 : i32 to index
    %c1 = arith.constant 1 : index
    %24 = memref.load %arg3[%23, %c1] : memref<2x16xf32, #tpu.memory_space<smem>>
    %25 = vector.broadcast %24 : f32 to vector<8x32xf32>
    %26 = arith.mulf %15, %25 : vector<8x32xf32>
    %27 = arith.addf %22, %26 : vector<8x32xf32>
    %28 = arith.index_cast %arg0 : i32 to index
    %c2 = arith.constant 2 : index
    %29 = memref.load %arg3[%28, %c2] : memref<2x16xf32, #tpu.memory_space<smem>>
    %30 = vector.broadcast %29 : f32 to vector<8x32xf32>
    %31 = arith.mulf %18, %30 : vector<8x32xf32>
    %32 = arith.addf %27, %31 : vector<8x32xf32>
    %33 = arith.index_cast %arg0 : i32 to index
    %c3 = arith.constant 3 : index
    %34 = memref.load %arg3[%33, %c3] : memref<2x16xf32, #tpu.memory_space<smem>>
    %35 = vector.broadcast %34 : f32 to vector<8x32xf32>
    %36 = arith.addf %32, %35 : vector<8x32xf32>
    %37 = arith.index_cast %arg0 : i32 to index
    %c4 = arith.constant 4 : index
    %38 = memref.load %arg3[%37, %c4] : memref<2x16xf32, #tpu.memory_space<smem>>
    %39 = vector.broadcast %38 : f32 to vector<8x32xf32>
    %40 = arith.mulf %10, %39 : vector<8x32xf32>
    %41 = arith.index_cast %arg0 : i32 to index
    %c5 = arith.constant 5 : index
    %42 = memref.load %arg3[%41, %c5] : memref<2x16xf32, #tpu.memory_space<smem>>
    %43 = vector.broadcast %42 : f32 to vector<8x32xf32>
    %44 = arith.mulf %15, %43 : vector<8x32xf32>
    %45 = arith.addf %40, %44 : vector<8x32xf32>
    %46 = arith.index_cast %arg0 : i32 to index
    %c6 = arith.constant 6 : index
    %47 = memref.load %arg3[%46, %c6] : memref<2x16xf32, #tpu.memory_space<smem>>
    %48 = vector.broadcast %47 : f32 to vector<8x32xf32>
    %49 = arith.mulf %18, %48 : vector<8x32xf32>
    %50 = arith.addf %45, %49 : vector<8x32xf32>
    %51 = arith.index_cast %arg0 : i32 to index
    %c7 = arith.constant 7 : index
    %52 = memref.load %arg3[%51, %c7] : memref<2x16xf32, #tpu.memory_space<smem>>
    %53 = vector.broadcast %52 : f32 to vector<8x32xf32>
    %54 = arith.addf %50, %53 : vector<8x32xf32>
    %55 = arith.index_cast %arg0 : i32 to index
    %c8 = arith.constant 8 : index
    %56 = memref.load %arg3[%55, %c8] : memref<2x16xf32, #tpu.memory_space<smem>>
    %57 = vector.broadcast %56 : f32 to vector<8x32xf32>
    %58 = arith.mulf %10, %57 : vector<8x32xf32>
    %59 = arith.index_cast %arg0 : i32 to index
    %c9 = arith.constant 9 : index
    %60 = memref.load %arg3[%59, %c9] : memref<2x16xf32, #tpu.memory_space<smem>>
    %61 = vector.broadcast %60 : f32 to vector<8x32xf32>
    %62 = arith.mulf %15, %61 : vector<8x32xf32>
    %63 = arith.addf %58, %62 : vector<8x32xf32>
    %64 = arith.index_cast %arg0 : i32 to index
    %c10 = arith.constant 10 : index
    %65 = memref.load %arg3[%64, %c10] : memref<2x16xf32, #tpu.memory_space<smem>>
    %66 = vector.broadcast %65 : f32 to vector<8x32xf32>
    %67 = arith.mulf %18, %66 : vector<8x32xf32>
    %68 = arith.addf %63, %67 : vector<8x32xf32>
    %69 = arith.index_cast %arg0 : i32 to index
    %c11 = arith.constant 11 : index
    %70 = memref.load %arg3[%69, %c11] : memref<2x16xf32, #tpu.memory_space<smem>>
    %71 = vector.broadcast %70 : f32 to vector<8x32xf32>
    %72 = arith.addf %68, %71 : vector<8x32xf32>
    %73 = arith.index_cast %arg0 : i32 to index
    %c12 = arith.constant 12 : index
    %74 = memref.load %arg3[%73, %c12] : memref<2x16xf32, #tpu.memory_space<smem>>
    %75 = vector.broadcast %74 : f32 to vector<8x32xf32>
    %76 = arith.mulf %10, %75 : vector<8x32xf32>
    %77 = arith.index_cast %arg0 : i32 to index
    %c13 = arith.constant 13 : index
    %78 = memref.load %arg3[%77, %c13] : memref<2x16xf32, #tpu.memory_space<smem>>
    %79 = vector.broadcast %78 : f32 to vector<8x32xf32>
    %80 = arith.mulf %15, %79 : vector<8x32xf32>
    %81 = arith.addf %76, %80 : vector<8x32xf32>
    %82 = arith.index_cast %arg0 : i32 to index
    %c14 = arith.constant 14 : index
    %83 = memref.load %arg3[%82, %c14] : memref<2x16xf32, #tpu.memory_space<smem>>
    %84 = vector.broadcast %83 : f32 to vector<8x32xf32>
    %85 = arith.mulf %18, %84 : vector<8x32xf32>
    %86 = arith.addf %81, %85 : vector<8x32xf32>
    %87 = arith.index_cast %arg0 : i32 to index
    %c15 = arith.constant 15 : index
    %88 = memref.load %arg3[%87, %c15] : memref<2x16xf32, #tpu.memory_space<smem>>
    %89 = vector.broadcast %88 : f32 to vector<8x32xf32>
    %90 = arith.addf %86, %89 : vector<8x32xf32>
    %cst = arith.constant 1.000000e+00 : f32
    %91 = vector.broadcast %cst : f32 to vector<8x32xf32>
    %92 = arith.divf %91, %90 : vector<8x32xf32>
    %93 = arith.mulf %36, %92 : vector<8x32xf32>
    %cst_1 = arith.constant 5.000000e-01 : f32
    %94 = vector.broadcast %cst_1 : f32 to vector<8x32xf32>
    %95 = arith.mulf %93, %94 : vector<8x32xf32>
    %cst_2 = arith.constant 5.000000e-01 : f32
    %96 = vector.broadcast %cst_2 : f32 to vector<8x32xf32>
    %97 = arith.addf %95, %96 : vector<8x32xf32>
    %98 = arith.mulf %54, %92 : vector<8x32xf32>
    %cst_3 = arith.constant 5.000000e-01 : f32
    %99 = vector.broadcast %cst_3 : f32 to vector<8x32xf32>
    %100 = arith.mulf %98, %99 : vector<8x32xf32>
    %cst_4 = arith.constant 5.000000e-01 : f32
    %101 = vector.broadcast %cst_4 : f32 to vector<8x32xf32>
    %102 = arith.addf %100, %101 : vector<8x32xf32>
    %cst_5 = arith.constant -1.000000e+00 : f32
    %cst_6 = arith.constant 2.000000e+00 : f32
    %103 = vector.broadcast %cst_5 : f32 to vector<8x32xf32>
    %104 = arith.maximumf %103, %97 : vector<8x32xf32>
    %105 = vector.broadcast %cst_6 : f32 to vector<8x32xf32>
    %106 = arith.minimumf %105, %104 : vector<8x32xf32>
    %cst_7 = arith.constant -1.000000e+00 : f32
    %cst_8 = arith.constant 2.000000e+00 : f32
    %107 = vector.broadcast %cst_7 : f32 to vector<8x32xf32>
    %108 = arith.maximumf %107, %102 : vector<8x32xf32>
    %109 = vector.broadcast %cst_8 : f32 to vector<8x32xf32>
    %110 = arith.minimumf %109, %108 : vector<8x32xf32>
    %cst_9 = arith.constant 1.600000e+01 : f32
    %111 = vector.broadcast %cst_9 : f32 to vector<8x32xf32>
    %112 = arith.mulf %106, %111 : vector<8x32xf32>
    %113 = arith.fptosi %112 : vector<8x32xf32> to vector<8x32xi32>
    %cst_10 = arith.constant 1.600000e+01 : f32
    %114 = vector.broadcast %cst_10 : f32 to vector<8x32xf32>
    %115 = arith.mulf %110, %114 : vector<8x32xf32>
    %116 = arith.fptosi %115 : vector<8x32xf32> to vector<8x32xi32>
    %c0_i32 = arith.constant 0 : i32
    %117 = vector.broadcast %c0_i32 : i32 to vector<8x32xi32>
    %118 = arith.cmpi sge, %113, %117 : vector<8x32xi32>
    %c16_i32 = arith.constant 16 : i32
    %119 = vector.broadcast %c16_i32 : i32 to vector<8x32xi32>
    %120 = arith.cmpi slt, %113, %119 : vector<8x32xi32>
    %121 = arith.andi %118, %120 : vector<8x32xi1>
    %c0_i32_11 = arith.constant 0 : i32
    %122 = vector.broadcast %c0_i32_11 : i32 to vector<8x32xi32>
    %123 = arith.cmpi sge, %116, %122 : vector<8x32xi32>
    %124 = arith.andi %121, %123 : vector<8x32xi1>
    %c16_i32_12 = arith.constant 16 : i32
    %125 = vector.broadcast %c16_i32_12 : i32 to vector<8x32xi32>
    %126 = arith.cmpi slt, %116, %125 : vector<8x32xi32>
    %127 = arith.andi %124, %126 : vector<8x32xi1>
    %cst_13 = arith.constant 0.000000e+00 : f32
    %128 = vector.broadcast %cst_13 : f32 to vector<8x32xf32>
    %129 = arith.cmpf oge, %72, %128 : vector<8x32xf32>
    %130 = arith.andi %127, %129 : vector<8x32xi1>
    %cst_14 = arith.constant 0.000000e+00 : f32
    %131 = vector.broadcast %cst_14 : f32 to vector<8x32xf32>
    %132 = arith.cmpf one, %90, %131 : vector<8x32xf32>
    %133 = arith.andi %130, %132 : vector<8x32xi1>
    %c0_i32_15 = arith.constant 0 : i32
    %c15_i32 = arith.constant 15 : i32
    %134 = vector.broadcast %c0_i32_15 : i32 to vector<8x32xi32>
    %135 = arith.maxsi %134, %116 : vector<8x32xi32>
    %136 = vector.broadcast %c15_i32 : i32 to vector<8x32xi32>
    %137 = arith.minsi %136, %135 : vector<8x32xi32>
    %c16_i32_16 = arith.constant 16 : i32
    %138 = vector.broadcast %c16_i32_16 : i32 to vector<8x32xi32>
    %139 = arith.muli %137, %138 : vector<8x32xi32>
    %c0_i32_17 = arith.constant 0 : i32
    %c15_i32_18 = arith.constant 15 : i32
    %140 = vector.broadcast %c0_i32_17 : i32 to vector<8x32xi32>
    %141 = arith.maxsi %140, %113 : vector<8x32xi32>
    %142 = vector.broadcast %c15_i32_18 : i32 to vector<8x32xi32>
    %143 = arith.minsi %142, %141 : vector<8x32xi32>
    %144 = arith.addi %139, %143 : vector<8x32xi32>
    %c256_i32_19 = arith.constant 256 : i32
    %145 = vector.broadcast %c256_i32_19 : i32 to vector<8x32xi32>
    %146 = arith.select %133, %144, %145 : vector<8x32xi1>, vector<8x32xi32>
    %147 = vector.shape_cast %146 : vector<8x32xi32> to vector<1x256xi32>
    %c0_20 = arith.constant 0 : index
    %c0_21 = arith.constant 0 : index
    %c0_22 = arith.constant 0 : index
    %148 = vector.load %arg2[%c0_20, %c0_21, %c0_22] : memref<1x8x384xf32, #tpu.memory_space<vmem>>, vector<1x8x384xf32>
    %149 = vector.shape_cast %148 : vector<1x8x384xf32> to vector<8x384xf32>
    %150 = vector.shape_cast %147 : vector<1x256xi32> to vector<1x256xi32>
    %151 = vector.broadcast %150 : vector<1x256xi32> to vector<8x256xi32>
    %152 = vector.shape_cast %151 : vector<8x256xi32> to vector<8x256x1xi32>
    %153 = vector.shape_cast %152 : vector<8x256x1xi32> to vector<8x256xi32>
    %154 = tpu.dynamic_gather %149[%153] in [1] : vector<8x384xf32>, vector<8x256xi32> -> vector<8x256xf32>
    %c0_23 = arith.constant 0 : index
    %c0_24 = arith.constant 0 : index
    %c0_25 = arith.constant 0 : index
    %155 = vector.load %arg4[%c0_23, %c0_24, %c0_25] : memref<1x8x256xf32, #tpu.memory_space<vmem>>, vector<1x8x256xf32>
    %156 = vector.shape_cast %155 : vector<1x8x256xf32> to vector<8x256xf32>
    %157 = vector.shape_cast %154 : vector<8x256xf32> to vector<1x8x256xf32>
    tpu.vector_store %arg4[%c0_23, %c0_24, %c0_25], %157 {strides = array<i32>} : memref<1x8x256xf32, #tpu.memory_space<vmem>>, vector<1x8x256xf32>,
    return
  }
  func.func @transform_0(%arg0: i32, %arg1: i32) -> (i32, i32, i32) {
    %c0_i32 = arith.constant 0 : i32
    %c0_i32_0 = arith.constant 0 : i32
    %c0_i32_1 = arith.constant 0 : i32
    return %arg0, %c0_i32, %c0_i32_0 : i32, i32, i32
  }
  func.func @transform_1(%arg0: i32, %arg1: i32) -> (i32, i32) {
    %c0_i32 = arith.constant 0 : i32
    %c0_i32_0 = arith.constant 0 : i32
    %c0_i32_1 = arith.constant 0 : i32
    return %c0_i32, %c0_i32_0 : i32, i32
  }
  func.func @transform_2(%arg0: i32, %arg1: i32) -> (i32, i32, i32) {
    %c0_i32 = arith.constant 0 : i32
    %c0_i32_0 = arith.constant 0 : i32
    return %arg0, %c0_i32, %arg1 : i32, i32, i32
  }
}

module attributes {stable_mosaic.version = 11 : i64} {
  func.func @_sample_grid2d_kernel(%arg0: i32, %arg1: i32, %arg2: memref<1x8x384xf32, #tpu.memory_space<vmem>>, %arg3: memref<2x16xf32, #tpu.memory_space<smem>>, %arg4: memref<1x8x256xf32, #tpu.memory_space<vmem>>) attributes {dimension_semantics = [#tpu.dimension_semantics<parallel>, #tpu.dimension_semantics<parallel>], iteration_bounds = array<i64: 2, 2>, scalar_prefetch = 0 : i64, scratch_operands = 0 : i64, tpu.core_type = #tpu.core_type<tc>, window_params = [{transform_indices = @transform_0, window_bounds = array<i64: 1, 8, 384>}, {transform_indices = @transform_1, window_bounds = array<i64: 2, 16>}, {transform_indices = @transform_2, window_bounds = array<i64: 1, 8, 256>}]} {
    %0 = tpu.iota {dimensions = array<i32: 0>} : vector<1x256xi32>
    %1 = tpu.iota {dimensions = array<i32: 1>} : vector<1x256xi32>
    %c256_i32 = arith.constant 256 : i32
    %2 = arith.muli %arg1, %c256_i32 : i32
    %c256_i32_0 = arith.constant 256 : i32
    %3 = vector.broadcast %c256_i32_0 : i32 to vector<1x256xi32>
    %4 = arith.muli %0, %3 : vector<1x256xi32>
    %5 = vector.broadcast %2 : i32 to vector<1x256xi32>
    %6 = arith.addi %5, %4 : vector<1x256xi32>
    %7 = arith.addi %6, %1 : vector<1x256xi32>
    %c7_i32 = arith.constant 7 : i32
    %8 = vector.broadcast %c7_i32 : i32 to vector<1x256xi32>
    %9 = arith.andi %7, %8 : vector<1x256xi32>
    %10 = arith.sitofp %9 : vector<1x256xi32> to vector<1x256xf32>
    %c3_i32 = arith.constant 3 : i32
    %11 = vector.broadcast %c3_i32 : i32 to vector<1x256xi32>
    %12 = arith.shrsi %7, %11 : vector<1x256xi32>
    %c7_i32_1 = arith.constant 7 : i32
    %13 = vector.broadcast %c7_i32_1 : i32 to vector<1x256xi32>
    %14 = arith.andi %12, %13 : vector<1x256xi32>
    %15 = arith.sitofp %14 : vector<1x256xi32> to vector<1x256xf32>
    %c6_i32 = arith.constant 6 : i32
    %16 = vector.broadcast %c6_i32 : i32 to vector<1x256xi32>
    %17 = arith.shrsi %7, %16 : vector<1x256xi32>
    %18 = arith.sitofp %17 : vector<1x256xi32> to vector<1x256xf32>
    %19 = arith.index_cast %arg0 : i32 to index
    %c0 = arith.constant 0 : index
    %20 = memref.load %arg3[%19, %c0] : memref<2x16xf32, #tpu.memory_space<smem>>
    %21 = vector.broadcast %20 : f32 to vector<1x256xf32>
    %22 = arith.mulf %10, %21 : vector<1x256xf32>
    %23 = arith.index_cast %arg0 : i32 to index
    %c1 = arith.constant 1 : index
    %24 = memref.load %arg3[%23, %c1] : memref<2x16xf32, #tpu.memory_space<smem>>
    %25 = vector.broadcast %24 : f32 to vector<1x256xf32>
    %26 = arith.mulf %15, %25 : vector<1x256xf32>
    %27 = arith.addf %22, %26 : vector<1x256xf32>
    %28 = arith.index_cast %arg0 : i32 to index
    %c2 = arith.constant 2 : index
    %29 = memref.load %arg3[%28, %c2] : memref<2x16xf32, #tpu.memory_space<smem>>
    %30 = vector.broadcast %29 : f32 to vector<1x256xf32>
    %31 = arith.mulf %18, %30 : vector<1x256xf32>
    %32 = arith.addf %27, %31 : vector<1x256xf32>
    %33 = arith.index_cast %arg0 : i32 to index
    %c3 = arith.constant 3 : index
    %34 = memref.load %arg3[%33, %c3] : memref<2x16xf32, #tpu.memory_space<smem>>
    %35 = vector.broadcast %34 : f32 to vector<1x256xf32>
    %36 = arith.addf %32, %35 : vector<1x256xf32>
    %37 = arith.index_cast %arg0 : i32 to index
    %c4 = arith.constant 4 : index
    %38 = memref.load %arg3[%37, %c4] : memref<2x16xf32, #tpu.memory_space<smem>>
    %39 = vector.broadcast %38 : f32 to vector<1x256xf32>
    %40 = arith.mulf %10, %39 : vector<1x256xf32>
    %41 = arith.index_cast %arg0 : i32 to index
    %c5 = arith.constant 5 : index
    %42 = memref.load %arg3[%41, %c5] : memref<2x16xf32, #tpu.memory_space<smem>>
    %43 = vector.broadcast %42 : f32 to vector<1x256xf32>
    %44 = arith.mulf %15, %43 : vector<1x256xf32>
    %45 = arith.addf %40, %44 : vector<1x256xf32>
    %46 = arith.index_cast %arg0 : i32 to index
    %c6 = arith.constant 6 : index
    %47 = memref.load %arg3[%46, %c6] : memref<2x16xf32, #tpu.memory_space<smem>>
    %48 = vector.broadcast %47 : f32 to vector<1x256xf32>
    %49 = arith.mulf %18, %48 : vector<1x256xf32>
    %50 = arith.addf %45, %49 : vector<1x256xf32>
    %51 = arith.index_cast %arg0 : i32 to index
    %c7 = arith.constant 7 : index
    %52 = memref.load %arg3[%51, %c7] : memref<2x16xf32, #tpu.memory_space<smem>>
    %53 = vector.broadcast %52 : f32 to vector<1x256xf32>
    %54 = arith.addf %50, %53 : vector<1x256xf32>
    %55 = arith.index_cast %arg0 : i32 to index
    %c8 = arith.constant 8 : index
    %56 = memref.load %arg3[%55, %c8] : memref<2x16xf32, #tpu.memory_space<smem>>
    %57 = vector.broadcast %56 : f32 to vector<1x256xf32>
    %58 = arith.mulf %10, %57 : vector<1x256xf32>
    %59 = arith.index_cast %arg0 : i32 to index
    %c9 = arith.constant 9 : index
    %60 = memref.load %arg3[%59, %c9] : memref<2x16xf32, #tpu.memory_space<smem>>
    %61 = vector.broadcast %60 : f32 to vector<1x256xf32>
    %62 = arith.mulf %15, %61 : vector<1x256xf32>
    %63 = arith.addf %58, %62 : vector<1x256xf32>
    %64 = arith.index_cast %arg0 : i32 to index
    %c10 = arith.constant 10 : index
    %65 = memref.load %arg3[%64, %c10] : memref<2x16xf32, #tpu.memory_space<smem>>
    %66 = vector.broadcast %65 : f32 to vector<1x256xf32>
    %67 = arith.mulf %18, %66 : vector<1x256xf32>
    %68 = arith.addf %63, %67 : vector<1x256xf32>
    %69 = arith.index_cast %arg0 : i32 to index
    %c11 = arith.constant 11 : index
    %70 = memref.load %arg3[%69, %c11] : memref<2x16xf32, #tpu.memory_space<smem>>
    %71 = vector.broadcast %70 : f32 to vector<1x256xf32>
    %72 = arith.addf %68, %71 : vector<1x256xf32>
    %73 = arith.index_cast %arg0 : i32 to index
    %c12 = arith.constant 12 : index
    %74 = memref.load %arg3[%73, %c12] : memref<2x16xf32, #tpu.memory_space<smem>>
    %75 = vector.broadcast %74 : f32 to vector<1x256xf32>
    %76 = arith.mulf %10, %75 : vector<1x256xf32>
    %77 = arith.index_cast %arg0 : i32 to index
    %c13 = arith.constant 13 : index
    %78 = memref.load %arg3[%77, %c13] : memref<2x16xf32, #tpu.memory_space<smem>>
    %79 = vector.broadcast %78 : f32 to vector<1x256xf32>
    %80 = arith.mulf %15, %79 : vector<1x256xf32>
    %81 = arith.addf %76, %80 : vector<1x256xf32>
    %82 = arith.index_cast %arg0 : i32 to index
    %c14 = arith.constant 14 : index
    %83 = memref.load %arg3[%82, %c14] : memref<2x16xf32, #tpu.memory_space<smem>>
    %84 = vector.broadcast %83 : f32 to vector<1x256xf32>
    %85 = arith.mulf %18, %84 : vector<1x256xf32>
    %86 = arith.addf %81, %85 : vector<1x256xf32>
    %87 = arith.index_cast %arg0 : i32 to index
    %c15 = arith.constant 15 : index
    %88 = memref.load %arg3[%87, %c15] : memref<2x16xf32, #tpu.memory_space<smem>>
    %89 = vector.broadcast %88 : f32 to vector<1x256xf32>
    %90 = arith.addf %86, %89 : vector<1x256xf32>
    %cst = arith.constant 1.000000e+00 : f32
    %91 = vector.broadcast %cst : f32 to vector<1x256xf32>
    %92 = arith.divf %91, %90 : vector<1x256xf32>
    %93 = arith.mulf %36, %92 : vector<1x256xf32>
    %cst_2 = arith.constant 5.000000e-01 : f32
    %94 = vector.broadcast %cst_2 : f32 to vector<1x256xf32>
    %95 = arith.mulf %93, %94 : vector<1x256xf32>
    %cst_3 = arith.constant 5.000000e-01 : f32
    %96 = vector.broadcast %cst_3 : f32 to vector<1x256xf32>
    %97 = arith.addf %95, %96 : vector<1x256xf32>
    %98 = arith.mulf %54, %92 : vector<1x256xf32>
    %cst_4 = arith.constant 5.000000e-01 : f32
    %99 = vector.broadcast %cst_4 : f32 to vector<1x256xf32>
    %100 = arith.mulf %98, %99 : vector<1x256xf32>
    %cst_5 = arith.constant 5.000000e-01 : f32
    %101 = vector.broadcast %cst_5 : f32 to vector<1x256xf32>
    %102 = arith.addf %100, %101 : vector<1x256xf32>
    %cst_6 = arith.constant -1.000000e+00 : f32
    %cst_7 = arith.constant 2.000000e+00 : f32
    %103 = vector.broadcast %cst_6 : f32 to vector<1x256xf32>
    %104 = arith.maximumf %103, %97 : vector<1x256xf32>
    %105 = vector.broadcast %cst_7 : f32 to vector<1x256xf32>
    %106 = arith.minimumf %105, %104 : vector<1x256xf32>
    %cst_8 = arith.constant -1.000000e+00 : f32
    %cst_9 = arith.constant 2.000000e+00 : f32
    %107 = vector.broadcast %cst_8 : f32 to vector<1x256xf32>
    %108 = arith.maximumf %107, %102 : vector<1x256xf32>
    %109 = vector.broadcast %cst_9 : f32 to vector<1x256xf32>
    %110 = arith.minimumf %109, %108 : vector<1x256xf32>
    %cst_10 = arith.constant 1.600000e+01 : f32
    %111 = vector.broadcast %cst_10 : f32 to vector<1x256xf32>
    %112 = arith.mulf %106, %111 : vector<1x256xf32>
    %113 = arith.fptosi %112 : vector<1x256xf32> to vector<1x256xi32>
    %cst_11 = arith.constant 1.600000e+01 : f32
    %114 = vector.broadcast %cst_11 : f32 to vector<1x256xf32>
    %115 = arith.mulf %110, %114 : vector<1x256xf32>
    %116 = arith.fptosi %115 : vector<1x256xf32> to vector<1x256xi32>
    %c0_i32 = arith.constant 0 : i32
    %117 = vector.broadcast %c0_i32 : i32 to vector<1x256xi32>
    %118 = arith.cmpi sge, %113, %117 : vector<1x256xi32>
    %c16_i32 = arith.constant 16 : i32
    %119 = vector.broadcast %c16_i32 : i32 to vector<1x256xi32>
    %120 = arith.cmpi slt, %113, %119 : vector<1x256xi32>
    %121 = arith.andi %118, %120 : vector<1x256xi1>
    %c0_i32_12 = arith.constant 0 : i32
    %122 = vector.broadcast %c0_i32_12 : i32 to vector<1x256xi32>
    %123 = arith.cmpi sge, %116, %122 : vector<1x256xi32>
    %124 = arith.andi %121, %123 : vector<1x256xi1>
    %c16_i32_13 = arith.constant 16 : i32
    %125 = vector.broadcast %c16_i32_13 : i32 to vector<1x256xi32>
    %126 = arith.cmpi slt, %116, %125 : vector<1x256xi32>
    %127 = arith.andi %124, %126 : vector<1x256xi1>
    %cst_14 = arith.constant 0.000000e+00 : f32
    %128 = vector.broadcast %cst_14 : f32 to vector<1x256xf32>
    %129 = arith.cmpf oge, %72, %128 : vector<1x256xf32>
    %130 = arith.andi %127, %129 : vector<1x256xi1>
    %cst_15 = arith.constant 0.000000e+00 : f32
    %131 = vector.broadcast %cst_15 : f32 to vector<1x256xf32>
    %132 = arith.cmpf one, %90, %131 : vector<1x256xf32>
    %133 = arith.andi %130, %132 : vector<1x256xi1>
    %c0_i32_16 = arith.constant 0 : i32
    %c15_i32 = arith.constant 15 : i32
    %134 = vector.broadcast %c0_i32_16 : i32 to vector<1x256xi32>
    %135 = arith.maxsi %134, %116 : vector<1x256xi32>
    %136 = vector.broadcast %c15_i32 : i32 to vector<1x256xi32>
    %137 = arith.minsi %136, %135 : vector<1x256xi32>
    %c16_i32_17 = arith.constant 16 : i32
    %138 = vector.broadcast %c16_i32_17 : i32 to vector<1x256xi32>
    %139 = arith.muli %137, %138 : vector<1x256xi32>
    %c0_i32_18 = arith.constant 0 : i32
    %c15_i32_19 = arith.constant 15 : i32
    %140 = vector.broadcast %c0_i32_18 : i32 to vector<1x256xi32>
    %141 = arith.maxsi %140, %113 : vector<1x256xi32>
    %142 = vector.broadcast %c15_i32_19 : i32 to vector<1x256xi32>
    %143 = arith.minsi %142, %141 : vector<1x256xi32>
    %144 = arith.addi %139, %143 : vector<1x256xi32>
    %c256_i32_20 = arith.constant 256 : i32
    %145 = vector.broadcast %c256_i32_20 : i32 to vector<1x256xi32>
    %146 = arith.select %133, %144, %145 : vector<1x256xi1>, vector<1x256xi32>
    %c0_21 = arith.constant 0 : index
    %c0_22 = arith.constant 0 : index
    %c0_23 = arith.constant 0 : index
    %147 = vector.load %arg2[%c0_21, %c0_22, %c0_23] : memref<1x8x384xf32, #tpu.memory_space<vmem>>, vector<1x8x384xf32>
    %148 = vector.shape_cast %147 : vector<1x8x384xf32> to vector<8x384xf32>
    %149 = vector.shape_cast %146 : vector<1x256xi32> to vector<1x256xi32>
    %150 = vector.broadcast %149 : vector<1x256xi32> to vector<8x256xi32>
    %151 = vector.shape_cast %150 : vector<8x256xi32> to vector<8x256x1xi32>
    %152 = vector.shape_cast %151 : vector<8x256x1xi32> to vector<8x256xi32>
    %153 = tpu.dynamic_gather %148[%152] in [1] : vector<8x384xf32>, vector<8x256xi32> -> vector<8x256xf32>
    %c0_24 = arith.constant 0 : index
    %c0_25 = arith.constant 0 : index
    %c0_26 = arith.constant 0 : index
    %154 = vector.load %arg4[%c0_24, %c0_25, %c0_26] : memref<1x8x256xf32, #tpu.memory_space<vmem>>, vector<1x8x256xf32>
    %155 = vector.shape_cast %154 : vector<1x8x256xf32> to vector<8x256xf32>
    %156 = vector.shape_cast %153 : vector<8x256xf32> to vector<1x8x256xf32>
    tpu.vector_store %arg4[%c0_24, %c0_25, %c0_26], %156 {strides = array<i32>} : memref<1x8x256xf32, #tpu.memory_space<vmem>>, vector<1x8x256xf32>,
    return
  }
  func.func @transform_0(%arg0: i32, %arg1: i32) -> (i32, i32, i32) {
    %c0_i32 = arith.constant 0 : i32
    %c0_i32_0 = arith.constant 0 : i32
    %c0_i32_1 = arith.constant 0 : i32
    return %arg0, %c0_i32, %c0_i32_0 : i32, i32, i32
  }
  func.func @transform_1(%arg0: i32, %arg1: i32) -> (i32, i32) {
    %c0_i32 = arith.constant 0 : i32
    %c0_i32_0 = arith.constant 0 : i32
    %c0_i32_1 = arith.constant 0 : i32
    return %c0_i32, %c0_i32_0 : i32, i32
  }
  func.func @transform_2(%arg0: i32, %arg1: i32) -> (i32, i32, i32) {
    %c0_i32 = arith.constant 0 : i32
    %c0_i32_0 = arith.constant 0 : i32
    return %arg0, %c0_i32, %arg1 : i32, i32, i32
  }
}

module attributes {stable_mosaic.version = 11 : i64} {
  func.func @_sample_grid2d_kernel(%arg0: i32, %arg1: i32, %arg2: memref<1x8x384xf32, #tpu.memory_space<vmem>>, %arg3: memref<2x16xf32, #tpu.memory_space<smem>>, %arg4: memref<1x8x256xf32, #tpu.memory_space<vmem>>) attributes {dimension_semantics = [#tpu.dimension_semantics<parallel>, #tpu.dimension_semantics<parallel>], iteration_bounds = array<i64: 2, 2>, scalar_prefetch = 0 : i64, scratch_operands = 0 : i64, tpu.core_type = #tpu.core_type<tc>, window_params = [{transform_indices = @transform_0, window_bounds = array<i64: 1, 8, 384>}, {transform_indices = @transform_1, window_bounds = array<i64: 2, 16>}, {transform_indices = @transform_2, window_bounds = array<i64: 1, 8, 256>}]} {
    %0 = tpu.iota {dimensions = array<i32: 0>} : vector<1x256xi32>
    %1 = tpu.iota {dimensions = array<i32: 1>} : vector<1x256xi32>
    %c256_i32 = arith.constant 256 : i32
    %2 = arith.muli %arg1, %c256_i32 : i32
    %c256_i32_0 = arith.constant 256 : i32
    %3 = vector.broadcast %c256_i32_0 : i32 to vector<1x256xi32>
    %4 = arith.muli %0, %3 : vector<1x256xi32>
    %5 = vector.broadcast %2 : i32 to vector<1x256xi32>
    %6 = arith.addi %5, %4 : vector<1x256xi32>
    %7 = arith.addi %6, %1 : vector<1x256xi32>
    %c7_i32 = arith.constant 7 : i32
    %8 = vector.broadcast %c7_i32 : i32 to vector<1x256xi32>
    %9 = arith.andi %7, %8 : vector<1x256xi32>
    %10 = arith.sitofp %9 : vector<1x256xi32> to vector<1x256xf32>
    %c3_i32 = arith.constant 3 : i32
    %11 = vector.broadcast %c3_i32 : i32 to vector<1x256xi32>
    %12 = arith.shrsi %7, %11 : vector<1x256xi32>
    %c7_i32_1 = arith.constant 7 : i32
    %13 = vector.broadcast %c7_i32_1 : i32 to vector<1x256xi32>
    %14 = arith.andi %12, %13 : vector<1x256xi32>
    %15 = arith.sitofp %14 : vector<1x256xi32> to vector<1x256xf32>
    %c6_i32 = arith.constant 6 : i32
    %16 = vector.broadcast %c6_i32 : i32 to vector<1x256xi32>
    %17 = arith.shrsi %7, %16 : vector<1x256xi32>
    %18 = arith.sitofp %17 : vector<1x256xi32> to vector<1x256xf32>
    %19 = arith.index_cast %arg0 : i32 to index
    %c0 = arith.constant 0 : index
    %20 = memref.load %arg3[%19, %c0] : memref<2x16xf32, #tpu.memory_space<smem>>
    %21 = vector.broadcast %20 : f32 to vector<1x256xf32>
    %22 = arith.mulf %10, %21 : vector<1x256xf32>
    %23 = arith.index_cast %arg0 : i32 to index
    %c1 = arith.constant 1 : index
    %24 = memref.load %arg3[%23, %c1] : memref<2x16xf32, #tpu.memory_space<smem>>
    %25 = vector.broadcast %24 : f32 to vector<1x256xf32>
    %26 = arith.mulf %15, %25 : vector<1x256xf32>
    %27 = arith.addf %22, %26 : vector<1x256xf32>
    %28 = arith.index_cast %arg0 : i32 to index
    %c2 = arith.constant 2 : index
    %29 = memref.load %arg3[%28, %c2] : memref<2x16xf32, #tpu.memory_space<smem>>
    %30 = vector.broadcast %29 : f32 to vector<1x256xf32>
    %31 = arith.mulf %18, %30 : vector<1x256xf32>
    %32 = arith.addf %27, %31 : vector<1x256xf32>
    %33 = arith.index_cast %arg0 : i32 to index
    %c3 = arith.constant 3 : index
    %34 = memref.load %arg3[%33, %c3] : memref<2x16xf32, #tpu.memory_space<smem>>
    %35 = vector.broadcast %34 : f32 to vector<1x256xf32>
    %36 = arith.addf %32, %35 : vector<1x256xf32>
    %37 = arith.index_cast %arg0 : i32 to index
    %c4 = arith.constant 4 : index
    %38 = memref.load %arg3[%37, %c4] : memref<2x16xf32, #tpu.memory_space<smem>>
    %39 = vector.broadcast %38 : f32 to vector<1x256xf32>
    %40 = arith.mulf %10, %39 : vector<1x256xf32>
    %41 = arith.index_cast %arg0 : i32 to index
    %c5 = arith.constant 5 : index
    %42 = memref.load %arg3[%41, %c5] : memref<2x16xf32, #tpu.memory_space<smem>>
    %43 = vector.broadcast %42 : f32 to vector<1x256xf32>
    %44 = arith.mulf %15, %43 : vector<1x256xf32>
    %45 = arith.addf %40, %44 : vector<1x256xf32>
    %46 = arith.index_cast %arg0 : i32 to index
    %c6 = arith.constant 6 : index
    %47 = memref.load %arg3[%46, %c6] : memref<2x16xf32, #tpu.memory_space<smem>>
    %48 = vector.broadcast %47 : f32 to vector<1x256xf32>
    %49 = arith.mulf %18, %48 : vector<1x256xf32>
    %50 = arith.addf %45, %49 : vector<1x256xf32>
    %51 = arith.index_cast %arg0 : i32 to index
    %c7 = arith.constant 7 : index
    %52 = memref.load %arg3[%51, %c7] : memref<2x16xf32, #tpu.memory_space<smem>>
    %53 = vector.broadcast %52 : f32 to vector<1x256xf32>
    %54 = arith.addf %50, %53 : vector<1x256xf32>
    %55 = arith.index_cast %arg0 : i32 to index
    %c8 = arith.constant 8 : index
    %56 = memref.load %arg3[%55, %c8] : memref<2x16xf32, #tpu.memory_space<smem>>
    %57 = vector.broadcast %56 : f32 to vector<1x256xf32>
    %58 = arith.mulf %10, %57 : vector<1x256xf32>
    %59 = arith.index_cast %arg0 : i32 to index
    %c9 = arith.constant 9 : index
    %60 = memref.load %arg3[%59, %c9] : memref<2x16xf32, #tpu.memory_space<smem>>
    %61 = vector.broadcast %60 : f32 to vector<1x256xf32>
    %62 = arith.mulf %15, %61 : vector<1x256xf32>
    %63 = arith.addf %58, %62 : vector<1x256xf32>
    %64 = arith.index_cast %arg0 : i32 to index
    %c10 = arith.constant 10 : index
    %65 = memref.load %arg3[%64, %c10] : memref<2x16xf32, #tpu.memory_space<smem>>
    %66 = vector.broadcast %65 : f32 to vector<1x256xf32>
    %67 = arith.mulf %18, %66 : vector<1x256xf32>
    %68 = arith.addf %63, %67 : vector<1x256xf32>
    %69 = arith.index_cast %arg0 : i32 to index
    %c11 = arith.constant 11 : index
    %70 = memref.load %arg3[%69, %c11] : memref<2x16xf32, #tpu.memory_space<smem>>
    %71 = vector.broadcast %70 : f32 to vector<1x256xf32>
    %72 = arith.addf %68, %71 : vector<1x256xf32>
    %73 = arith.index_cast %arg0 : i32 to index
    %c12 = arith.constant 12 : index
    %74 = memref.load %arg3[%73, %c12] : memref<2x16xf32, #tpu.memory_space<smem>>
    %75 = vector.broadcast %74 : f32 to vector<1x256xf32>
    %76 = arith.mulf %10, %75 : vector<1x256xf32>
    %77 = arith.index_cast %arg0 : i32 to index
    %c13 = arith.constant 13 : index
    %78 = memref.load %arg3[%77, %c13] : memref<2x16xf32, #tpu.memory_space<smem>>
    %79 = vector.broadcast %78 : f32 to vector<1x256xf32>
    %80 = arith.mulf %15, %79 : vector<1x256xf32>
    %81 = arith.addf %76, %80 : vector<1x256xf32>
    %82 = arith.index_cast %arg0 : i32 to index
    %c14 = arith.constant 14 : index
    %83 = memref.load %arg3[%82, %c14] : memref<2x16xf32, #tpu.memory_space<smem>>
    %84 = vector.broadcast %83 : f32 to vector<1x256xf32>
    %85 = arith.mulf %18, %84 : vector<1x256xf32>
    %86 = arith.addf %81, %85 : vector<1x256xf32>
    %87 = arith.index_cast %arg0 : i32 to index
    %c15 = arith.constant 15 : index
    %88 = memref.load %arg3[%87, %c15] : memref<2x16xf32, #tpu.memory_space<smem>>
    %89 = vector.broadcast %88 : f32 to vector<1x256xf32>
    %90 = arith.addf %86, %89 : vector<1x256xf32>
    %cst = arith.constant 1.000000e+00 : f32
    %91 = vector.broadcast %cst : f32 to vector<1x256xf32>
    %92 = arith.divf %91, %90 : vector<1x256xf32>
    %93 = arith.mulf %36, %92 : vector<1x256xf32>
    %cst_2 = arith.constant 5.000000e-01 : f32
    %94 = vector.broadcast %cst_2 : f32 to vector<1x256xf32>
    %95 = arith.mulf %93, %94 : vector<1x256xf32>
    %cst_3 = arith.constant 5.000000e-01 : f32
    %96 = vector.broadcast %cst_3 : f32 to vector<1x256xf32>
    %97 = arith.addf %95, %96 : vector<1x256xf32>
    %98 = arith.mulf %54, %92 : vector<1x256xf32>
    %cst_4 = arith.constant 5.000000e-01 : f32
    %99 = vector.broadcast %cst_4 : f32 to vector<1x256xf32>
    %100 = arith.mulf %98, %99 : vector<1x256xf32>
    %cst_5 = arith.constant 5.000000e-01 : f32
    %101 = vector.broadcast %cst_5 : f32 to vector<1x256xf32>
    %102 = arith.addf %100, %101 : vector<1x256xf32>
    %cst_6 = arith.constant -1.000000e+00 : f32
    %cst_7 = arith.constant 2.000000e+00 : f32
    %103 = vector.broadcast %cst_6 : f32 to vector<1x256xf32>
    %104 = arith.maximumf %103, %97 : vector<1x256xf32>
    %105 = vector.broadcast %cst_7 : f32 to vector<1x256xf32>
    %106 = arith.minimumf %105, %104 : vector<1x256xf32>
    %cst_8 = arith.constant -1.000000e+00 : f32
    %cst_9 = arith.constant 2.000000e+00 : f32
    %107 = vector.broadcast %cst_8 : f32 to vector<1x256xf32>
    %108 = arith.maximumf %107, %102 : vector<1x256xf32>
    %109 = vector.broadcast %cst_9 : f32 to vector<1x256xf32>
    %110 = arith.minimumf %109, %108 : vector<1x256xf32>
    %cst_10 = arith.constant 1.600000e+01 : f32
    %111 = vector.broadcast %cst_10 : f32 to vector<1x256xf32>
    %112 = arith.mulf %106, %111 : vector<1x256xf32>
    %113 = arith.fptosi %112 : vector<1x256xf32> to vector<1x256xi32>
    %cst_11 = arith.constant 1.600000e+01 : f32
    %114 = vector.broadcast %cst_11 : f32 to vector<1x256xf32>
    %115 = arith.mulf %110, %114 : vector<1x256xf32>
    %116 = arith.fptosi %115 : vector<1x256xf32> to vector<1x256xi32>
    %c0_i32 = arith.constant 0 : i32
    %117 = vector.broadcast %c0_i32 : i32 to vector<1x256xi32>
    %118 = arith.cmpi sge, %113, %117 : vector<1x256xi32>
    %c16_i32 = arith.constant 16 : i32
    %119 = vector.broadcast %c16_i32 : i32 to vector<1x256xi32>
    %120 = arith.cmpi slt, %113, %119 : vector<1x256xi32>
    %121 = arith.andi %118, %120 : vector<1x256xi1>
    %c0_i32_12 = arith.constant 0 : i32
    %122 = vector.broadcast %c0_i32_12 : i32 to vector<1x256xi32>
    %123 = arith.cmpi sge, %116, %122 : vector<1x256xi32>
    %124 = arith.andi %121, %123 : vector<1x256xi1>
    %c16_i32_13 = arith.constant 16 : i32
    %125 = vector.broadcast %c16_i32_13 : i32 to vector<1x256xi32>
    %126 = arith.cmpi slt, %116, %125 : vector<1x256xi32>
    %127 = arith.andi %124, %126 : vector<1x256xi1>
    %cst_14 = arith.constant 0.000000e+00 : f32
    %128 = vector.broadcast %cst_14 : f32 to vector<1x256xf32>
    %129 = arith.cmpf oge, %72, %128 : vector<1x256xf32>
    %130 = arith.andi %127, %129 : vector<1x256xi1>
    %cst_15 = arith.constant 0.000000e+00 : f32
    %131 = vector.broadcast %cst_15 : f32 to vector<1x256xf32>
    %132 = arith.cmpf one, %90, %131 : vector<1x256xf32>
    %133 = arith.andi %130, %132 : vector<1x256xi1>
    %c0_i32_16 = arith.constant 0 : i32
    %c15_i32 = arith.constant 15 : i32
    %134 = vector.broadcast %c0_i32_16 : i32 to vector<1x256xi32>
    %135 = arith.maxsi %134, %116 : vector<1x256xi32>
    %136 = vector.broadcast %c15_i32 : i32 to vector<1x256xi32>
    %137 = arith.minsi %136, %135 : vector<1x256xi32>
    %c16_i32_17 = arith.constant 16 : i32
    %138 = vector.broadcast %c16_i32_17 : i32 to vector<1x256xi32>
    %139 = arith.muli %137, %138 : vector<1x256xi32>
    %c0_i32_18 = arith.constant 0 : i32
    %c15_i32_19 = arith.constant 15 : i32
    %140 = vector.broadcast %c0_i32_18 : i32 to vector<1x256xi32>
    %141 = arith.maxsi %140, %113 : vector<1x256xi32>
    %142 = vector.broadcast %c15_i32_19 : i32 to vector<1x256xi32>
    %143 = arith.minsi %142, %141 : vector<1x256xi32>
    %144 = arith.addi %139, %143 : vector<1x256xi32>
    %c256_i32_20 = arith.constant 256 : i32
    %145 = vector.broadcast %c256_i32_20 : i32 to vector<1x256xi32>
    %146 = arith.select %133, %144, %145 : vector<1x256xi1>, vector<1x256xi32>
    %c0_21 = arith.constant 0 : index
    %c0_22 = arith.constant 0 : index
    %c0_23 = arith.constant 0 : index
    %147 = vector.load %arg2[%c0_21, %c0_22, %c0_23] : memref<1x8x384xf32, #tpu.memory_space<vmem>>, vector<1x8x384xf32>
    %148 = vector.shape_cast %147 : vector<1x8x384xf32> to vector<8x384xf32>
    %149 = tpu.iota {dimensions = array<i32: 0>} : vector<384x256xi32>
    %150 = vector.broadcast %146 : vector<1x256xi32> to vector<384x256xi32>
    %151 = arith.cmpi eq, %149, %150 : vector<384x256xi32>
    %152 = arith.extui %151 : vector<384x256xi1> to vector<384x256xi32>
    %153 = arith.sitofp %152 : vector<384x256xi32> to vector<384x256xf32>
    %cst_24 = arith.constant dense<0.000000e+00> : vector<8x256xf32>
    %154 = tpu.matmul %148, %153, %cst_24 {dimension_numbers = #tpu.dot_dimension_numbers<[1], [0], [0], [1], [0, 0, 1, 1], [], []>} : vector<8x384xf32>, vector<384x256xf32>, vector<8x256xf32> -> vector<8x256xf32>
    %c0_25 = arith.constant 0 : index
    %c0_26 = arith.constant 0 : index
    %c0_27 = arith.constant 0 : index
    %155 = vector.load %arg4[%c0_25, %c0_26, %c0_27] : memref<1x8x256xf32, #tpu.memory_space<vmem>>, vector<1x8x256xf32>
    %156 = vector.shape_cast %155 : vector<1x8x256xf32> to vector<8x256xf32>
    %157 = vector.shape_cast %154 : vector<8x256xf32> to vector<1x8x256xf32>
    tpu.vector_store %arg4[%c0_25, %c0_26, %c0_27], %157 {strides = array<i32>} : memref<1x8x256xf32, #tpu.memory_space<vmem>>, vector<1x8x256xf32>,
    return
  }
  func.func @transform_0(%arg0: i32, %arg1: i32) -> (i32, i32, i32) {
    %c0_i32 = arith.constant 0 : i32
    %c0_i32_0 = arith.constant 0 : i32
    %c0_i32_1 = arith.constant 0 : i32
    return %arg0, %c0_i32, %c0_i32_0 : i32, i32, i32
  }
  func.func @transform_1(%arg0: i32, %arg1: i32) -> (i32, i32) {
    %c0_i32 = arith.constant 0 : i32
    %c0_i32_0 = arith.constant 0 : i32
    %c0_i32_1 = arith.constant 0 : i32
    return %c0_i32, %c0_i32_0 : i32, i32
  }
  func.func @transform_2(%arg0: i32, %arg1: i32) -> (i32, i32, i32) {
    %c0_i32 = arith.constant 0 : i32
    %c0_i32_0 = arith.constant 0 : i32
    return %arg0, %c0_i32, %arg1 : i32, i32, i32
  }
}

</mosaic_0001>

<llo_original>
// kernel: tpu_custom_call.1
$region0: #{tpu_custom_call.1}
  #allocation0 [shape = 'u32[]', space=smem, size = 0x4, offset = 0x4, fixed_abs, tag = 'smem constant byte address 0x4 - core index']
  #allocation1 [shape = 'u32[144,128]{1,0:T(1,128)}', space=vmem, size = 0x12000, scoped, tag = 'internal scratch']
  %s0 = inlined_call_operand.hbm [shape: f32[2,8,384], index: 0, kind: input, shape index: {}]
  %s1 = inlined_call_operand.vmem [shape: f32[2,16], index: 1, kind: input, shape index: {}]
  %s2 = inlined_call_operand.hbm [shape: f32[2,8,512], index: 2, kind: output, shape index: {}]
  %s3 = sld [smem:[#allocation0]]
  $region49: #{tpu_custom_call.1} parent=0
    _
  %s5 = ssub.s32 1, %s3
  %s6 = scalar_select 0, %s5, %s3
  $region1: #{tpu_custom_call.1} parent=0
    #allocation2 [shape = 'u8[24576]{0}', space=vmem, size = 0x6000, scoped, tag = 'input window, operand 0']
    #allocation3 [shape = 's32[2]{0}', space=sflag, size = 0x8, scoped, tag = 'scoped memory for tpu_custom_call.1']
    #allocation4 [shape = 's32[2]{0}', space=sflag, size = 0x8, scoped, tag = 'scoped memory for tpu_custom_call.1']
    #allocation5 [shape = 's32[2]{0}', space=sflag, size = 0x8, scoped, tag = 'scoped memory for tpu_custom_call.1']
    #allocation6 [shape = 'u8[1024]{0}', space=smem, size = 0x400, scoped, tag = 'input window, operand 1, single buffered']
    #allocation7 [shape = 'u8[16384]{0}', space=vmem, size = 0x4000, scoped, tag = 'output window, operand 0']
    %7 = vsyncpa [#allocation3], 0
    %s8 = scalar_lea.sflag [#allocation3], 1
    %9 = vsyncpa %s8, 0
    %10 = vsyncpa [#allocation5], 0
    %11 = vsyncpa [#allocation4], 0
    %s12 = scalar_lea.sflag [#allocation4], 1
    %13 = vsyncpa %s12, 0
    loop: start=0, step=1, limit=6
    $region2: #{tpu_custom_call.1} parent=1 // loop_pre_header
      _
    $region3: #{tpu_custom_call.1} parent=1 // loop_header
      %s15 = sphi 0, %s19
      %p16 = scmp.ge.s32.totalorder %s15, 6
      %s22 = sphi 0, %s34
      %s23 = sphi 0, %s30
      %s24 = sphi 0, %s22
      %s25 = sphi 0, %s23
      %s26 = sphi 0, %s24
      %s27 = sphi 0, %s25
      %s37 = sphi 0, %s39
      %s40 = sphi 0, %s37
      %s41 = sphi 0, %s40
      %s57 = sphi 0, %s41
      %s61 = sphi 0, %s61
      %s63 = sphi 0, %s61
      %s64 = sphi 0, %s63
      %s78 = sphi 0, %s64
      %s86 = sphi 0, %s88
      %s89 = sphi 0, %s86
      %s90 = sphi 0, %s89
      %s106 = sphi 0, %s90
    $region4: #{tpu_custom_call.1} parent=1 // loop_header_branch
      %18 = sbr.rel (%p16) target = $region8
    $region5: #{tpu_custom_call.1} parent=1 // loop_body
      %s20 = ssub.s32 %s15, 1
      %s21 = ssub.s32 %s15, 2
      %s28 = sadd.s32 1, %s23
      %p29 = scmp.ge.s32.totalorder %s28, 2
      %s30 = scalar_select %p29, 0, %s28
      %s31 = sadd.s32 1, %s22
      %s32 = scalar_select %p29, %s31, %s22
      %p33 = scmp.ge.s32.totalorder %s32, 2
      %s34 = scalar_select %p33, 0, %s32
      %s35 = ssub.s32 %s22, %s34
      %p36 = scmp.eq.s32.totalorder %s35, 0
      %s38 = sadd.s32 %s37, 1
      %s39 = scalar_select %p36, %s37, %s38
      %p42 = pneg %p36
      %p43 = scmp.eq.s32.totalorder %s15, 3
      %p44 = por %p42, %p43
      %p45 = scmp.ne.s32.totalorder %s37, %s40
      %p46 = scmp.eq.s32.totalorder %s15, 0
      %p47 = por %p45, %p46
      %p48 = scmp.ne.s32.totalorder %s37, %s40
      %p49 = scmp.eq.s32.totalorder %s20, 3
      %p50 = por %p48, %p49
      %p51 = scmp.ne.s32.totalorder %s40, %s41
      %p52 = scmp.eq.s32.totalorder %s20, 0
      %p53 = por %p51, %p52
      %p54 = scmp.ne.s32.totalorder %s40, %s41
      %p55 = scmp.eq.s32.totalorder %s21, 3
      %p56 = por %p54, %p55
      %p58 = scmp.ne.s32.totalorder %s41, %s57
      %p59 = scmp.eq.s32.totalorder %s21, 0
      %p60 = por %p58, %p59
      %s62 = sadd.s32 %s61, 1
      %p65 = scmp.eq.s32.totalorder %s15, 3
      %p66 = scmp.ne.s32.totalorder %s61, %s63
      %p67 = scmp.eq.s32.totalorder %s15, 0
      %p68 = por %p66, %p67
      %p69 = scmp.ne.s32.totalorder %s61, %s63
      %p70 = scmp.eq.s32.totalorder %s20, 3
      %p71 = por %p69, %p70
      %p72 = scmp.ne.s32.totalorder %s63, %s64
      %p73 = scmp.eq.s32.totalorder %s20, 0
      %p74 = por %p72, %p73
      %p75 = scmp.ne.s32.totalorder %s63, %s64
      %p76 = scmp.eq.s32.totalorder %s21, 3
      %p77 = por %p75, %p76
      %p79 = scmp.ne.s32.totalorder %s64, %s78
      %p80 = scmp.eq.s32.totalorder %s21, 0
      %p81 = por %p79, %p80
      %s82 = ssub.s32 %s22, %s34
      %s83 = ssub.s32 %s23, %s30
      %s84 = sor.u32 %s82, %s83
      %p85 = scmp.eq.s32.totalorder %s84, 0
      %s87 = sadd.s32 %s86, 1
      %s88 = scalar_select %p85, %s86, %s87
      %p91 = pneg %p85
      %p92 = scmp.eq.s32.totalorder %s15, 3
      %p93 = por %p91, %p92
      %p94 = scmp.ne.s32.totalorder %s86, %s89
      %p95 = scmp.eq.s32.totalorder %s15, 0
      %p96 = por %p94, %p95
      %p97 = scmp.ne.s32.totalorder %s86, %s89
      %p98 = scmp.eq.s32.totalorder %s20, 3
      %p99 = por %p97, %p98
      %p100 = scmp.ne.s32.totalorder %s89, %s90
      %p101 = scmp.eq.s32.totalorder %s20, 0
      %p102 = por %p100, %p101
      %p103 = scmp.ne.s32.totalorder %s89, %s90
      %p104 = scmp.eq.s32.totalorder %s21, 3
      %p105 = por %p103, %p104
      %p107 = scmp.ne.s32.totalorder %s90, %s106
      %p108 = scmp.eq.s32.totalorder %s21, 0
      %p109 = por %p107, %p108
      %p110 = scmp.le.s32.totalorder 1, %s15
      %p111 = scmp.lt.s32.totalorder %s15, 5
      %p112 = pnand %p110, %p111
      %p113 = pneg %p112
      // Predicated region
      $region9: #{tpu_custom_call.1} parent=5 // pred_check
        _
      $region10: #{tpu_custom_call.1} parent=5 // pred_check_branch
        %115 = sbr.rel (%p112) target = $region12
      $region11: #{tpu_custom_call.1} parent=5 // pred_region
        %s116 = ssub.s32 %s15, 1
        // Predicated region
        $region13: #{tpu_custom_call.1} parent=11 // pred_check
          %p117 = pneg %p74
        $region14: #{tpu_custom_call.1} parent=11 // pred_check_branch
          %119 = sbr.rel (%p117) target = $region16
        $region15: #{tpu_custom_call.1} parent=11 // pred_region
          %s121 = ssub.s32 32, 32
          %122 = vsyncadd [#allocation5], %s121
          %s124 = sshll.u32 %s1, 4
          %s125 = int_to_ptr.vmem [resolvable:$true] %s124
          %127 = dma.vmem_to_smem %s125, 32, [#allocation6], [#allocation5]
        $region16: #{tpu_custom_call.1} parent=11 // pred_fallthru
          _
      $region12: #{tpu_custom_call.1} parent=5 // pred_fallthru
        _
      %p128 = scmp.lt.s32.totalorder %s15, 4
      // Predicated region
      $region17: #{tpu_custom_call.1} parent=5 // pred_check
        %p129 = pneg %p128
      $region18: #{tpu_custom_call.1} parent=5 // pred_check_branch
        %131 = sbr.rel (%p129) target = $region20
      $region19: #{tpu_custom_call.1} parent=5 // pred_region
        // Predicated region
        $region21: #{tpu_custom_call.1} parent=19 // pred_check
          %p132 = pneg %p47
        $region22: #{tpu_custom_call.1} parent=19 // pred_check_branch
          %134 = sbr.rel (%p132) target = $region24
        $region23: #{tpu_custom_call.1} parent=19 // pred_region
          %s135 = sand.u32 %s37, 1
          %s136 = scalar_lea.sflag [#allocation3], %s135
          %s137 = sand.u32 %s37, 1
          %s138 = smul.addr %s137, 24
          %s139 = scalar_lea.vmem [#allocation2], %s138
          %s141 = ssub.s32 384, 384
          %142 = vsyncadd %s136, %s141
          %s143 = smul.addr %s22, 3
          %s144 = smul.addr %s143, 128
          %s145 = scalar_lea.hbm %s0, %s144
          %s147 = sshll.u32 %s139, 4
          %s148 = int_to_ptr.vmem [resolvable:$true] %s147
          %150 = dma.hbm_to_vmem [thread:$0]  %s145, 384, %s148, %s136
        $region24: #{tpu_custom_call.1} parent=19 // pred_fallthru
          _
      $region20: #{tpu_custom_call.1} parent=5 // pred_fallthru
        _
      %p151 = scmp.le.s32.totalorder 1, %s15
      %p152 = scmp.lt.s32.totalorder %s15, 5
      %p153 = pnand %p151, %p152
      %p154 = pneg %p153
      // Predicated region
      $region25: #{tpu_custom_call.1} parent=5 // pred_check
        _
      $region26: #{tpu_custom_call.1} parent=5 // pred_check_branch
        %156 = sbr.rel (%p153) target = $region28
      $region27: #{tpu_custom_call.1} parent=5 // pred_region
        %s157 = ssub.s32 %s15, 1
        %s158 = sand.u32 %s40, 1
        %s159 = scalar_lea.sflag [#allocation3], %s158
        %s160 = sand.u32 %s40, 1
        %s161 = smul.addr %s160, 24
        %s162 = scalar_lea.vmem [#allocation2], %s161
        // Predicated region
        $region29: #{tpu_custom_call.1} parent=27 // pred_check
          %p163 = pneg %p53
        $region30: #{tpu_custom_call.1} parent=27 // pred_check_branch
          %165 = sbr.rel (%p163) target = $region32
        $region31: #{tpu_custom_call.1} parent=27 // pred_region
          %166 = dma.done %s159, 384
        $region32: #{tpu_custom_call.1} parent=27 // pred_fallthru
          _
        // Predicated region
        $region33: #{tpu_custom_call.1} parent=27 // pred_check
          %p167 = pneg %p74
        $region34: #{tpu_custom_call.1} parent=27 // pred_check_branch
          %169 = sbr.rel (%p167) target = $region36
        $region35: #{tpu_custom_call.1} parent=27 // pred_region
          %170 = dma.done [#allocation5], 32
        $region36: #{tpu_custom_call.1} parent=27 // pred_fallthru
          _
        %171 = sfence
        %s172 = sand.u32 %s40, 1
        %s173 = scalar_lea.sflag [#allocation3], %s172
        %s174 = sand.u32 %s40, 1
        %s175 = smul.addr %s174, 24
        %s176 = scalar_lea.vmem [#allocation2], %s175
        %p177 = pneg %p53
        %p178 = pneg %p50
        %p179 = pneg %p74
        %p180 = pneg %p71
        %p181 = pneg %p102
        %p182 = pneg %p99
        %s183 = sand.u32 %s89, 1
        %s184 = scalar_lea.sflag [#allocation4], %s183
        %s185 = sand.u32 %s89, 1
        %s186 = smul.addr %s185, 16
        %s187 = scalar_lea.vmem [#allocation7], %s186
        %s188 = smul.u32 2, %s25
        %v189 = vlaneseq
        %v190 = vshrl.u32 %v189, 7
        %v191 = vlaneseq
        %v192 = vand.u32 %v191, 127
        %v193 = vadd.s32 %v192, 128
        %s194 = smul.u32 %s25, 256
        %v195 = vmul.u32 %v190, 256
        %v196 = vstv %s194
        %v197 = vadd.s32 %v196, %v195
        %v198 = vadd.s32 %v197, %v192
        %v199 = vadd.s32 %v197, %v193
        %v200 = vand.u32 %v198, 7
        %v201 = vand.u32 %v199, 7
        %v202 = vcvt.s32.f32 %v200
        %v203 = vcvt.s32.f32 %v201
        %v204 = vshra.s32 %v198, 3
        %v205 = vshra.s32 %v199, 3
        %v206 = vand.u32 %v204, 7
        %v207 = vand.u32 %v205, 7
        %v208 = vcvt.s32.f32 %v206
        %v209 = vcvt.s32.f32 %v207
        %v210 = vshra.s32 %v198, 6
        %v211 = vshra.s32 %v199, 6
        %v212 = vcvt.s32.f32 %v210
        %v213 = vcvt.s32.f32 %v211
        %s214 = smul.u32 %s24, 128
        %s215 = sld [smem:[#allocation6 + %s214]]
        %v216 = vstv %s215
        %v217 = vmul.f32 %v202, %v216
        %v218 = vmul.f32 %v203, %v216
        %s219 = sadd.s32 %s214, 1
        %s220 = sld [smem:[#allocation6 + %s219]]
        %v221 = vstv %s220
        %v222 = vmul.f32 %v208, %v221
        %v223 = vmul.f32 %v209, %v221
        %v224 = vadd.f32 %v217, %v222
        %v225 = vadd.f32 %v218, %v223
        %s226 = sadd.s32 %s214, 2
        %s227 = sld [smem:[#allocation6 + %s226]]
        %v228 = vstv %s227
        %v229 = vmul.f32 %v212, %v228
        %v230 = vmul.f32 %v213, %v228
        %v231 = vadd.f32 %v224, %v229
        %v232 = vadd.f32 %v225, %v230
        %s233 = sadd.s32 %s214, 3
        %s234 = sld [smem:[#allocation6 + %s233]]
        %v235 = vstv %s234
        %v236 = vadd.f32 %v231, %v235
        %v237 = vadd.f32 %v232, %v235
        %s238 = sadd.s32 %s214, 4
        %s239 = sld [smem:[#allocation6 + %s238]]
        %v240 = vstv %s239
        %v241 = vmul.f32 %v202, %v240
        %v242 = vmul.f32 %v203, %v240
        %s243 = sadd.s32 %s214, 5
        %s244 = sld [smem:[#allocation6 + %s243]]
        %v245 = vstv %s244
        %v246 = vmul.f32 %v208, %v245
        %v247 = vmul.f32 %v209, %v245
        %v248 = vadd.f32 %v241, %v246
        %v249 = vadd.f32 %v242, %v247
        %s250 = sadd.s32 %s214, 6
        %s251 = sld [smem:[#allocation6 + %s250]]
        %v252 = vstv %s251
        %v253 = vmul.f32 %v212, %v252
        %v254 = vmul.f32 %v213, %v252
        %v255 = vadd.f32 %v248, %v253
        %v256 = vadd.f32 %v249, %v254
        %s257 = sadd.s32 %s214, 7
        %s258 = sld [smem:[#allocation6 + %s257]]
        %v259 = vstv %s258
        %v260 = vadd.f32 %v255, %v259
        %v261 = vadd.f32 %v256, %v259
        %s262 = sadd.s32 %s214, 8
        %s263 = sld [smem:[#allocation6 + %s262]]
        %v264 = vstv %s263
        %v265 = vmul.f32 %v202, %v264
        %v266 = vmul.f32 %v203, %v264
        %s267 = sadd.s32 %s214, 9
        %s268 = sld [smem:[#allocation6 + %s267]]
        %v269 = vstv %s268
        %v270 = vmul.f32 %v208, %v269
        %v271 = vmul.f32 %v209, %v269
        %v272 = vadd.f32 %v265, %v270
        %v273 = vadd.f32 %v266, %v271
        %s274 = sadd.s32 %s214, 10
        %s275 = sld [smem:[#allocation6 + %s274]]
        %v276 = vstv %s275
        %v277 = vmul.f32 %v212, %v276
        %v278 = vmul.f32 %v213, %v276
        %v279 = vadd.f32 %v272, %v277
        %v280 = vadd.f32 %v273, %v278
        %s281 = sadd.s32 %s214, 11
        %s282 = sld [smem:[#allocation6 + %s281]]
        %v283 = vstv %s282
        %v284 = vadd.f32 %v279, %v283
        %v285 = vadd.f32 %v280, %v283
        %s286 = sadd.s32 %s214, 12
        %s287 = sld [smem:[#allocation6 + %s286]]
        %v288 = vstv %s287
        %v289 = vmul.f32 %v202, %v288
        %v290 = vmul.f32 %v203, %v288
        %s291 = sadd.s32 %s214, 13
        %s292 = sld [smem:[#allocation6 + %s291]]
        %v293 = vstv %s292
        %v294 = vmul.f32 %v208, %v293
        %v295 = vmul.f32 %v209, %v293
        %v296 = vadd.f32 %v289, %v294
        %v297 = vadd.f32 %v290, %v295
        %s298 = sadd.s32 %s214, 14
        %s299 = sld [smem:[#allocation6 + %s298]]
        %v300 = vstv %s299
        %v301 = vmul.f32 %v212, %v300
        %v302 = vmul.f32 %v213, %v300
        %v303 = vadd.f32 %v296, %v301
        %v304 = vadd.f32 %v297, %v302
        %s305 = sadd.s32 %s214, 15
        %s306 = sld [smem:[#allocation6 + %s305]]
        %v307 = vstv %s306
        %v308 = vadd.f32 %v303, %v307
        %v309 = vadd.f32 %v304, %v307
        %v310 = vrcp.pop %v308
        %v311 = vmul.f32 1.0, %v310
        %v312 = vrcp.pop %v309
        %v313 = vmul.f32 1.0, %v312
        %v314 = vmul.f32 %v236, %v311
        %v315 = vmul.f32 %v237, %v313
        %v316 = vmul.f32 %v314, 0.5
        %v317 = vmul.f32 %v315, 0.5
        %v318 = vadd.f32 %v316, 0.5
        %v319 = vadd.f32 %v317, 0.5
        %v320 = vmul.f32 %v260, %v311
        %v321 = vmul.f32 %v261, %v313
        %v322 = vmul.f32 %v320, 0.5
        %v323 = vmul.f32 %v321, 0.5
        %v324 = vadd.f32 %v322, 0.5
        %v325 = vadd.f32 %v323, 0.5
        %v326 = vmax.f32 %v318, -1.0
        %v327 = vmax.f32 %v319, -1.0
        %v328 = vmin.f32 %v326, 2.0
        %v329 = vmin.f32 %v327, 2.0
        %v330 = vmax.f32 %v324, -1.0
        %v331 = vmax.f32 %v325, -1.0
        %v332 = vmin.f32 %v330, 2.0
        %v333 = vmin.f32 %v331, 2.0
        %v334 = vmul.f32 %v328, 16.0
        %v335 = vmul.f32 %v329, 16.0
        %v336 = vcvt.f32.s32.to.zero.pseudo %v334
        %v337 = vcvt.f32.s32.to.zero.pseudo %v335
        %v338 = vmul.f32 %v332, 16.0
        %v339 = vmul.f32 %v333, 16.0
        %v340 = vcvt.f32.s32.to.zero.pseudo %v338
        %v341 = vcvt.f32.s32.to.zero.pseudo %v339
        %vm342 = vcmp.ge.s32.totalorder %v336, 0
        %vm343 = vcmp.ge.s32.totalorder %v337, 0
        %vm344 = vcmp.lt.s32.totalorder %v336, 16
        %vm345 = vcmp.lt.s32.totalorder %v337, 16
        %vm346 = vmand %vm342, %vm344
        %vm347 = vmand %vm343, %vm345
        %vm348 = vcmp.ge.s32.totalorder %v340, 0
        %vm349 = vcmp.ge.s32.totalorder %v341, 0
        %vm350 = vmand %vm346, %vm348
        %vm351 = vmand %vm347, %vm349
        %vm352 = vcmp.lt.s32.totalorder %v340, 16
        %vm353 = vcmp.lt.s32.totalorder %v341, 16
        %vm354 = vmand %vm350, %vm352
        %vm355 = vmand %vm351, %vm353
        %vm356 = vcmp.ge.f32.partialorder %v284, 0.0
        %vm357 = vcmp.ge.f32.partialorder %v285, 0.0
        %vm358 = vmand %vm354, %vm356
        %vm359 = vmand %vm355, %vm357
        %vm360 = vcmp.ne.f32.partialorder %v308, 0.0
        %vm361 = vcmp.ne.f32.partialorder %v309, 0.0
        %vm362 = vmand %vm358, %vm360
        %vm363 = vmand %vm359, %vm361
        %vm364 = vcmp.gt.s32.totalorder %v340, 0
        %v365 = vsel %vm364, %v340, 0
        %vm366 = vcmp.gt.s32.totalorder %v341, 0
        %v367 = vsel %vm366, %v341, 0
        %vm368 = vcmp.lt.s32.totalorder %v365, 15
        %v369 = vsel %vm368, %v365, 15
        %vm370 = vcmp.lt.s32.totalorder %v367, 15
        %v371 = vsel %vm370, %v367, 15
        %v372 = vmul.u32 %v369, 16
        %v373 = vmul.u32 %v371, 16
        %vm374 = vcmp.gt.s32.totalorder %v336, 0
        %v375 = vsel %vm374, %v336, 0
        %vm376 = vcmp.gt.s32.totalorder %v337, 0
        %v377 = vsel %vm376, %v337, 0
        %vm378 = vcmp.lt.s32.totalorder %v375, 15
        %v379 = vsel %vm378, %v375, 15
        %vm380 = vcmp.lt.s32.totalorder %v377, 15
        %v381 = vsel %vm380, %v377, 15
        %v382 = vadd.s32 %v372, %v379
        %v383 = vadd.s32 %v373, %v381
        %v384 = vsel %vm362, %v382, 256
        %v385 = vsel %vm363, %v383, 256
        %v386 = vld [vmem:[%s162] sm:$0xff]
        %v387 = vld [vmem:[%s162 + $0x8] sm:$0xff]
        %v388 = vld [vmem:[%s162 + $0x10] sm:$0xff]
        %v389 = vadd.s32 %v190, 8
        %v390 = vadd.s32 %v190, 16
        %v391 = vadd.s32 %v190, 24
        %v392 = vadd.s32 %v190, 32
        %v393 = vadd.s32 %v190, 40
        %v394 = vadd.s32 %v190, 48
        %v395 = vadd.s32 %v190, 56
        %v396 = vadd.s32 %v190, 64
        %v397 = vadd.s32 %v190, 72
        %v398 = vadd.s32 %v190, 80
        %v399 = vadd.s32 %v190, 88
        %v400 = vadd.s32 %v190, 96
        %v401 = vadd.s32 %v190, 104
        %v402 = vadd.s32 %v190, 112
        %v403 = vadd.s32 %v190, 120
        %v404 = vadd.s32 %v190, 128
        %v405 = vadd.s32 %v190, 136
        %v406 = vadd.s32 %v190, 144
        %v407 = vadd.s32 %v190, 152
        %v408 = vadd.s32 %v190, 160
        %v409 = vadd.s32 %v190, 168
        %v410 = vadd.s32 %v190, 176
        %v411 = vadd.s32 %v190, 184
        %v412 = vadd.s32 %v190, 192
        %v413 = vadd.s32 %v190, 200
        %v414 = vadd.s32 %v190, 208
        %v415 = vadd.s32 %v190, 216
        %v416 = vadd.s32 %v190, 224
        %v417 = vadd.s32 %v190, 232
        %v418 = vadd.s32 %v190, 240
        %v419 = vadd.s32 %v190, 248
        %v420 = vadd.s32 %v190, 256
        %v421 = vadd.s32 %v190, 264
        %v422 = vadd.s32 %v190, 272
        %v423 = vadd.s32 %v190, 280
        %v424 = vadd.s32 %v190, 288
        %v425 = vadd.s32 %v190, 296
        %v426 = vadd.s32 %v190, 304
        %v427 = vadd.s32 %v190, 312
        %v428 = vadd.s32 %v190, 320
        %v429 = vadd.s32 %v190, 328
        %v430 = vadd.s32 %v190, 336
        %v431 = vadd.s32 %v190, 344
        %v432 = vadd.s32 %v190, 352
        %v433 = vadd.s32 %v190, 360
        %v434 = vadd.s32 %v190, 368
        %v435 = vadd.s32 %v190, 376
        %v436 = vlaneseq
        %v437 = vshrl.u32 %v436, 7
        %v438 = vsub.s32 0, %v437
        %v439 = vrot.slane %v384, %v438
        %v440 = vlaneseq
        %v441 = vshrl.u32 %v440, 7
        %v442 = vsub.s32 0, %v441
        %v443 = vrot.slane %v385, %v442
        %vm444 = vcmp.eq.s32.totalorder %v190, %v439
        %vm445 = vcmp.eq.s32.totalorder %v190, %v443
        %vm446 = vcmp.eq.s32.totalorder %v389, %v439
        %vm447 = vcmp.eq.s32.totalorder %v389, %v443
        %vm448 = vcmp.eq.s32.totalorder %v390, %v439
        %vm449 = vcmp.eq.s32.totalorder %v390, %v443
        %vm450 = vcmp.eq.s32.totalorder %v391, %v439
        %vm451 = vcmp.eq.s32.totalorder %v391, %v443
        %vm452 = vcmp.eq.s32.totalorder %v392, %v439
        %vm453 = vcmp.eq.s32.totalorder %v392, %v443
        %vm454 = vcmp.eq.s32.totalorder %v393, %v439
        %vm455 = vcmp.eq.s32.totalorder %v393, %v443
        %vm456 = vcmp.eq.s32.totalorder %v394, %v439
        %vm457 = vcmp.eq.s32.totalorder %v394, %v443
        %vm458 = vcmp.eq.s32.totalorder %v395, %v439
        %vm459 = vcmp.eq.s32.totalorder %v395, %v443
        %vm460 = vcmp.eq.s32.totalorder %v396, %v439
        %vm461 = vcmp.eq.s32.totalorder %v396, %v443
        %vm462 = vcmp.eq.s32.totalorder %v397, %v439
        %vm463 = vcmp.eq.s32.totalorder %v397, %v443
        %vm464 = vcmp.eq.s32.totalorder %v398, %v439
        %vm465 = vcmp.eq.s32.totalorder %v398, %v443
        %vm466 = vcmp.eq.s32.totalorder %v399, %v439
        %vm467 = vcmp.eq.s32.totalorder %v399, %v443
        %vm468 = vcmp.eq.s32.totalorder %v400, %v439
        %vm469 = vcmp.eq.s32.totalorder %v400, %v443
        %vm470 = vcmp.eq.s32.totalorder %v401, %v439
        %vm471 = vcmp.eq.s32.totalorder %v401, %v443
        %vm472 = vcmp.eq.s32.totalorder %v402, %v439
        %vm473 = vcmp.eq.s32.totalorder %v402, %v443
        %vm474 = vcmp.eq.s32.totalorder %v403, %v439
        %vm475 = vcmp.eq.s32.totalorder %v403, %v443
        %vm476 = vcmp.eq.s32.totalorder %v404, %v439
        %vm477 = vcmp.eq.s32.totalorder %v404, %v443
        %vm478 = vcmp.eq.s32.totalorder %v405, %v439
        %vm479 = vcmp.eq.s32.totalorder %v405, %v443
        %vm480 = vcmp.eq.s32.totalorder %v406, %v439
        %vm481 = vcmp.eq.s32.totalorder %v406, %v443
        %vm482 = vcmp.eq.s32.totalorder %v407, %v439
        %vm483 = vcmp.eq.s32.totalorder %v407, %v443
        %vm484 = vcmp.eq.s32.totalorder %v408, %v439
        %vm485 = vcmp.eq.s32.totalorder %v408, %v443
        %vm486 = vcmp.eq.s32.totalorder %v409, %v439
        %vm487 = vcmp.eq.s32.totalorder %v409, %v443
        %vm488 = vcmp.eq.s32.totalorder %v410, %v439
        %vm489 = vcmp.eq.s32.totalorder %v410, %v443
        %vm490 = vcmp.eq.s32.totalorder %v411, %v439
        %vm491 = vcmp.eq.s32.totalorder %v411, %v443
        %vm492 = vcmp.eq.s32.totalorder %v412, %v439
        %vm493 = vcmp.eq.s32.totalorder %v412, %v443
        %vm494 = vcmp.eq.s32.totalorder %v413, %v439
        %vm495 = vcmp.eq.s32.totalorder %v413, %v443
        %vm496 = vcmp.eq.s32.totalorder %v414, %v439
        %vm497 = vcmp.eq.s32.totalorder %v414, %v443
        %vm498 = vcmp.eq.s32.totalorder %v415, %v439
        %vm499 = vcmp.eq.s32.totalorder %v415, %v443
        %vm500 = vcmp.eq.s32.totalorder %v416, %v439
        %vm501 = vcmp.eq.s32.totalorder %v416, %v443
        %vm502 = vcmp.eq.s32.totalorder %v417, %v439
        %vm503 = vcmp.eq.s32.totalorder %v417, %v443
        %vm504 = vcmp.eq.s32.totalorder %v418, %v439
        %vm505 = vcmp.eq.s32.totalorder %v418, %v443
        %vm506 = vcmp.eq.s32.totalorder %v419, %v439
        %vm507 = vcmp.eq.s32.totalorder %v419, %v443
        %vm508 = vcmp.eq.s32.totalorder %v420, %v439
        %vm509 = vcmp.eq.s32.totalorder %v420, %v443
        %vm510 = vcmp.eq.s32.totalorder %v421, %v439
        %vm511 = vcmp.eq.s32.totalorder %v421, %v443
        %vm512 = vcmp.eq.s32.totalorder %v422, %v439
        %vm513 = vcmp.eq.s32.totalorder %v422, %v443
        %vm514 = vcmp.eq.s32.totalorder %v423, %v439
        %vm515 = vcmp.eq.s32.totalorder %v423, %v443
        %vm516 = vcmp.eq.s32.totalorder %v424, %v439
        %vm517 = vcmp.eq.s32.totalorder %v424, %v443
        %vm518 = vcmp.eq.s32.totalorder %v425, %v439
        %vm519 = vcmp.eq.s32.totalorder %v425, %v443
        %vm520 = vcmp.eq.s32.totalorder %v426, %v439
        %vm521 = vcmp.eq.s32.totalorder %v426, %v443
        %vm522 = vcmp.eq.s32.totalorder %v427, %v439
        %vm523 = vcmp.eq.s32.totalorder %v427, %v443
        %vm524 = vcmp.eq.s32.totalorder %v428, %v439
        %vm525 = vcmp.eq.s32.totalorder %v428, %v443
        %vm526 = vcmp.eq.s32.totalorder %v429, %v439
        %vm527 = vcmp.eq.s32.totalorder %v429, %v443
        %vm528 = vcmp.eq.s32.totalorder %v430, %v439
        %vm529 = vcmp.eq.s32.totalorder %v430, %v443
        %vm530 = vcmp.eq.s32.totalorder %v431, %v439
        %vm531 = vcmp.eq.s32.totalorder %v431, %v443
        %vm532 = vcmp.eq.s32.totalorder %v432, %v439
        %vm533 = vcmp.eq.s32.totalorder %v432, %v443
        %vm534 = vcmp.eq.s32.totalorder %v433, %v439
        %vm535 = vcmp.eq.s32.totalorder %v433, %v443
        %vm536 = vcmp.eq.s32.totalorder %v434, %v439
        %vm537 = vcmp.eq.s32.totalorder %v434, %v443
        %vm538 = vcmp.eq.s32.totalorder %v435, %v439
        %vm539 = vcmp.eq.s32.totalorder %v435, %v443
        %v540 = vsel %vm444, 1, 0
        %v541 = vsel %vm445, 1, 0
        %v542 = vsel %vm446, 1, 0
        %v543 = vsel %vm447, 1, 0
        %v544 = vsel %vm448, 1, 0
        %v545 = vsel %vm449, 1, 0
        %v546 = vsel %vm450, 1, 0
        %v547 = vsel %vm451, 1, 0
        %v548 = vsel %vm452, 1, 0
        %v549 = vsel %vm453, 1, 0
        %v550 = vsel %vm454, 1, 0
        %v551 = vsel %vm455, 1, 0
        %v552 = vsel %vm456, 1, 0
        %v553 = vsel %vm457, 1, 0
        %v554 = vsel %vm458, 1, 0
        %v555 = vsel %vm459, 1, 0
        %v556 = vsel %vm460, 1, 0
        %v557 = vsel %vm461, 1, 0
        %v558 = vsel %vm462, 1, 0
        %v559 = vsel %vm463, 1, 0
        %v560 = vsel %vm464, 1, 0
        %v561 = vsel %vm465, 1, 0
        %v562 = vsel %vm466, 1, 0
        %v563 = vsel %vm467, 1, 0
        %v564 = vsel %vm468, 1, 0
        %v565 = vsel %vm469, 1, 0
        %v566 = vsel %vm470, 1, 0
        %v567 = vsel %vm471, 1, 0
        %v568 = vsel %vm472, 1, 0
        %v569 = vsel %vm473, 1, 0
        %v570 = vsel %vm474, 1, 0
        %v571 = vsel %vm475, 1, 0
        %v572 = vsel %vm476, 1, 0
        %v573 = vsel %vm477, 1, 0
        %v574 = vsel %vm478, 1, 0
        %v575 = vsel %vm479, 1, 0
        %v576 = vsel %vm480, 1, 0
        %v577 = vsel %vm481, 1, 0
        %v578 = vsel %vm482, 1, 0
        %v579 = vsel %vm483, 1, 0
        %v580 = vsel %vm484, 1, 0
        %v581 = vsel %vm485, 1, 0
        %v582 = vsel %vm486, 1, 0
        %v583 = vsel %vm487, 1, 0
        %v584 = vsel %vm488, 1, 0
        %v585 = vsel %vm489, 1, 0
        %v586 = vsel %vm490, 1, 0
        %v587 = vsel %vm491, 1, 0
        %v588 = vsel %vm492, 1, 0
        %v589 = vsel %vm493, 1, 0
        %v590 = vsel %vm494, 1, 0
        %v591 = vsel %vm495, 1, 0
        %v592 = vsel %vm496, 1, 0
        %v593 = vsel %vm497, 1, 0
        %v594 = vsel %vm498, 1, 0
        %v595 = vsel %vm499, 1, 0
        %v596 = vsel %vm500, 1, 0
        %v597 = vsel %vm501, 1, 0
        %v598 = vsel %vm502, 1, 0
        %v599 = vsel %vm503, 1, 0
        %v600 = vsel %vm504, 1, 0
        %v601 = vsel %vm505, 1, 0
        %v602 = vsel %vm506, 1, 0
        %v603 = vsel %vm507, 1, 0
        %v604 = vsel %vm508, 1, 0
        %v605 = vsel %vm509, 1, 0
        %v606 = vsel %vm510, 1, 0
        %v607 = vsel %vm511, 1, 0
        %v608 = vsel %vm512, 1, 0
        %v609 = vsel %vm513, 1, 0
        %v610 = vsel %vm514, 1, 0
        %v611 = vsel %vm515, 1, 0
        %v612 = vsel %vm516, 1, 0
        %v613 = vsel %vm517, 1, 0
        %v614 = vsel %vm518, 1, 0
        %v615 = vsel %vm519, 1, 0
        %v616 = vsel %vm520, 1, 0
        %v617 = vsel %vm521, 1, 0
        %v618 = vsel %vm522, 1, 0
        %v619 = vsel %vm523, 1, 0
        %v620 = vsel %vm524, 1, 0
        %v621 = vsel %vm525, 1, 0
        %v622 = vsel %vm526, 1, 0
        %v623 = vsel %vm527, 1, 0
        %v624 = vsel %vm528, 1, 0
        %v625 = vsel %vm529, 1, 0
        %v626 = vsel %vm530, 1, 0
        %v627 = vsel %vm531, 1, 0
        %v628 = vsel %vm532, 1, 0
        %v629 = vsel %vm533, 1, 0
        %v630 = vsel %vm534, 1, 0
        %v631 = vsel %vm535, 1, 0
        %v632 = vsel %vm536, 1, 0
        %v633 = vsel %vm537, 1, 0
        %v634 = vsel %vm538, 1, 0
        %v635 = vsel %vm539, 1, 0
        %v636 = vcvt.s32.f32 %v540
        %v637 = vcvt.s32.f32 %v541
        %v638 = vcvt.s32.f32 %v542
        %v639 = vcvt.s32.f32 %v543
        %v640 = vcvt.s32.f32 %v544
        %v641 = vcvt.s32.f32 %v545
        %v642 = vcvt.s32.f32 %v546
        %v643 = vcvt.s32.f32 %v547
        %v644 = vcvt.s32.f32 %v548
        %v645 = vcvt.s32.f32 %v549
        %v646 = vcvt.s32.f32 %v550
        %v647 = vcvt.s32.f32 %v551
        %v648 = vcvt.s32.f32 %v552
        %v649 = vcvt.s32.f32 %v553
        %v650 = vcvt.s32.f32 %v554
        %v651 = vcvt.s32.f32 %v555
        %v652 = vcvt.s32.f32 %v556
        %v653 = vcvt.s32.f32 %v557
        %v654 = vcvt.s32.f32 %v558
        %v655 = vcvt.s32.f32 %v559
        %v656 = vcvt.s32.f32 %v560
        %v657 = vcvt.s32.f32 %v561
        %v658 = vcvt.s32.f32 %v562
        %v659 = vcvt.s32.f32 %v563
        %v660 = vcvt.s32.f32 %v564
        %v661 = vcvt.s32.f32 %v565
        %v662 = vcvt.s32.f32 %v566
        %v663 = vcvt.s32.f32 %v567
        %v664 = vcvt.s32.f32 %v568
        %v665 = vcvt.s32.f32 %v569
        %v666 = vcvt.s32.f32 %v570
        %v667 = vcvt.s32.f32 %v571
        %v668 = vcvt.s32.f32 %v572
        %v669 = vcvt.s32.f32 %v573
        %v670 = vcvt.s32.f32 %v574
        %v671 = vcvt.s32.f32 %v575
        %v672 = vcvt.s32.f32 %v576
        %v673 = vcvt.s32.f32 %v577
        %v674 = vcvt.s32.f32 %v578
        %v675 = vcvt.s32.f32 %v579
        %v676 = vcvt.s32.f32 %v580
        %v677 = vcvt.s32.f32 %v581
        %v678 = vcvt.s32.f32 %v582
        %v679 = vcvt.s32.f32 %v583
        %v680 = vcvt.s32.f32 %v584
        %v681 = vcvt.s32.f32 %v585
        %v682 = vcvt.s32.f32 %v586
        %v683 = vcvt.s32.f32 %v587
        %v684 = vcvt.s32.f32 %v588
        %v685 = vcvt.s32.f32 %v589
        %v686 = vcvt.s32.f32 %v590
        %v687 = vcvt.s32.f32 %v591
        %v688 = vcvt.s32.f32 %v592
        %v689 = vcvt.s32.f32 %v593
        %v690 = vcvt.s32.f32 %v594
        %v691 = vcvt.s32.f32 %v595
        %v692 = vcvt.s32.f32 %v596
        %v693 = vcvt.s32.f32 %v597
        %v694 = vcvt.s32.f32 %v598
        %v695 = vcvt.s32.f32 %v599
        %v696 = vcvt.s32.f32 %v600
        %v697 = vcvt.s32.f32 %v601
        %v698 = vcvt.s32.f32 %v602
        %v699 = vcvt.s32.f32 %v603
        %v700 = vcvt.s32.f32 %v604
        %v701 = vcvt.s32.f32 %v605
        %v702 = vcvt.s32.f32 %v606
        %v703 = vcvt.s32.f32 %v607
        %v704 = vcvt.s32.f32 %v608
        %v705 = vcvt.s32.f32 %v609
        %v706 = vcvt.s32.f32 %v610
        %v707 = vcvt.s32.f32 %v611
        %v708 = vcvt.s32.f32 %v612
        %v709 = vcvt.s32.f32 %v613
        %v710 = vcvt.s32.f32 %v614
        %v711 = vcvt.s32.f32 %v615
        %v712 = vcvt.s32.f32 %v616
        %v713 = vcvt.s32.f32 %v617
        %v714 = vcvt.s32.f32 %v618
        %v715 = vcvt.s32.f32 %v619
        %v716 = vcvt.s32.f32 %v620
        %v717 = vcvt.s32.f32 %v621
        %v718 = vcvt.s32.f32 %v622
        %v719 = vcvt.s32.f32 %v623
        %v720 = vcvt.s32.f32 %v624
        %v721 = vcvt.s32.f32 %v625
        %v722 = vcvt.s32.f32 %v626
        %v723 = vcvt.s32.f32 %v627
        %v724 = vcvt.s32.f32 %v628
        %v725 = vcvt.s32.f32 %v629
        %v726 = vcvt.s32.f32 %v630
        %v727 = vcvt.s32.f32 %v631
        %v728 = vcvt.s32.f32 %v632
        %v729 = vcvt.s32.f32 %v633
        %v730 = vcvt.s32.f32 %v634
        %v731 = vcvt.s32.f32 %v635
        %732 = vmatprep.subr.mxu0 %v637
        %733 = vmatpush1.msra.mxu0 %v636
        %734 = vmatprep.subr.mxu0 %v639
        %735 = vmatpush1.msra.mxu0 %v638
        %736 = vmatprep.subr.mxu0 %v641
        %737 = vmatpush1.msra.mxu0 %v640
        %738 = vmatprep.subr.mxu0 %v643
        %739 = vmatpush1.msra.mxu0 %v642
        %740 = vmatprep.subr.mxu0 %v645
        %741 = vmatpush1.msra.mxu0 %v644
        %742 = vmatprep.subr.mxu0 %v647
        %743 = vmatpush1.msra.mxu0 %v646
        %744 = vmatprep.subr.mxu0 %v649
        %745 = vmatpush1.msra.mxu0 %v648
        %746 = vmatprep.subr.mxu0 %v651
        %747 = vmatpush1.msra.mxu0 %v650
        %748 = vmatprep.subr.mxu0 %v653
        %749 = vmatpush1.msra.mxu0 %v652
        %750 = vmatprep.subr.mxu0 %v655
        %751 = vmatpush1.msra.mxu0 %v654
        %752 = vmatprep.subr.mxu0 %v657
        %753 = vmatpush1.msra.mxu0 %v656
        %754 = vmatprep.subr.mxu0 %v659
        %755 = vmatpush1.msra.mxu0 %v658
        %756 = vmatprep.subr.mxu0 %v661
        %757 = vmatpush1.msra.mxu0 %v660
        %758 = vmatprep.subr.mxu0 %v663
        %759 = vmatpush1.msra.mxu0 %v662
        %760 = vmatprep.subr.mxu0 %v665
        %761 = vmatpush1.msra.mxu0 %v664
        %762 = vmatprep.subr.mxu0 %v667
        %763 = vmatpush1.msra.mxu0 %v666
        %764 = vmatprep.subr.mxu0 %v669
        %765 = vmatpush1.msra.mxu0 %v668
        %766 = vmatprep.subr.mxu0 %v671
        %767 = vmatpush1.msra.mxu0 %v670
        %768 = vmatprep.subr.mxu0 %v673
        %769 = vmatpush1.msra.mxu0 %v672
        %770 = vmatprep.subr.mxu0 %v675
        %771 = vmatpush1.msra.mxu0 %v674
        %772 = vmatprep.subr.mxu0 %v677
        %773 = vmatpush1.msra.mxu0 %v676
        %774 = vmatprep.subr.mxu0 %v679
        %775 = vmatpush1.msra.mxu0 %v678
        %776 = vmatprep.subr.mxu0 %v681
        %777 = vmatpush1.msra.mxu0 %v680
        %778 = vmatprep.subr.mxu0 %v683
        %779 = vmatpush1.msra.mxu0 %v682
        %780 = vmatprep.subr.mxu0 %v685
        %781 = vmatpush1.msra.mxu0 %v684
        %782 = vmatprep.subr.mxu0 %v687
        %783 = vmatpush1.msra.mxu0 %v686
        %784 = vmatprep.subr.mxu0 %v689
        %785 = vmatpush1.msra.mxu0 %v688
        %786 = vmatprep.subr.mxu0 %v691
        %787 = vmatpush1.msra.mxu0 %v690
        %788 = vmatprep.subr.mxu0 %v693
        %789 = vmatpush1.msra.mxu0 %v692
        %790 = vmatprep.subr.mxu0 %v695
        %791 = vmatpush1.msra.mxu0 %v694
        %792 = vmatprep.subr.mxu0 %v697
        %793 = vmatpush1.msra.mxu0 %v696
        %794 = vmatprep.subr.mxu0 %v699
        %795 = vmatpush1.msra.mxu0 %v698
        %796 = vmatprep.mubr.f32.mxu0 %v387
        %797 = vmatmul.mubr.f32.gmra.mrb[0].mxu0 %v386
        %v798 = vpop.f32.mrb[0].mxu0
        %v799 = vadd.f32 0.0, %v798
        %v800 = vpop.f32.mrb[0].mxu0
        %v801 = vadd.f32 0.0, %v800
        %802 = vdwg.mxu0
        %803 = vmatprep.subr.mxu0 %v701
        %804 = vmatpush1.msra.mxu0 %v700
        %805 = vmatprep.subr.mxu0 %v703
        %806 = vmatpush1.msra.mxu0 %v702
        %807 = vmatprep.subr.mxu0 %v705
        %808 = vmatpush1.msra.mxu0 %v704
        %809 = vmatprep.subr.mxu0 %v707
        %810 = vmatpush1.msra.mxu0 %v706
        %811 = vmatprep.subr.mxu0 %v709
        %812 = vmatpush1.msra.mxu0 %v708
        %813 = vmatprep.subr.mxu0 %v711
        %814 = vmatpush1.msra.mxu0 %v710
        %815 = vmatprep.subr.mxu0 %v713
        %816 = vmatpush1.msra.mxu0 %v712
        %817 = vmatprep.subr.mxu0 %v715
        %818 = vmatpush1.msra.mxu0 %v714
        %819 = vmatprep.subr.mxu0 %v717
        %820 = vmatpush1.msra.mxu0 %v716
        %821 = vmatprep.subr.mxu0 %v719
        %822 = vmatpush1.msra.mxu0 %v718
        %823 = vmatprep.subr.mxu0 %v721
        %824 = vmatpush1.msra.mxu0 %v720
        %825 = vmatprep.subr.mxu0 %v723
        %826 = vmatpush1.msra.mxu0 %v722
        %827 = vmatprep.subr.mxu0 %v725
        %828 = vmatpush1.msra.mxu0 %v724
        %829 = vmatprep.subr.mxu0 %v727
        %830 = vmatpush1.msra.mxu0 %v726
        %831 = vmatprep.subr.mxu0 %v729
        %832 = vmatpush1.msra.mxu0 %v728
        %833 = vmatprep.subr.mxu0 %v731
        %834 = vmatpush1.msra.mxu0 %v730
        %835 = vmatprep.subr.mxu0 0.0
        %836 = vmatpush1.msra.mxu0 0.0
        %837 = vmatprep.subr.mxu0 0.0
        %838 = vmatpush1.msra.mxu0 0.0
        %839 = vmatprep.subr.mxu0 0.0
        %840 = vmatpush1.msra.mxu0 0.0
        %841 = vmatprep.subr.mxu0 0.0
        %842 = vmatpush1.msra.mxu0 0.0
        %843 = vmatprep.subr.mxu0 0.0
        %844 = vmatpush1.msra.mxu0 0.0
        %845 = vmatprep.subr.mxu0 0.0
        %846 = vmatpush1.msra.mxu0 0.0
        %847 = vmatprep.subr.mxu0 0.0
        %848 = vmatpush1.msra.mxu0 0.0
        %849 = vmatprep.subr.mxu0 0.0
        %850 = vmatpush1.msra.mxu0 0.0
        %851 = vmatprep.subr.mxu0 0.0
        %852 = vmatpush1.msra.mxu0 0.0
        %853 = vmatprep.subr.mxu0 0.0
        %854 = vmatpush1.msra.mxu0 0.0
        %855 = vmatprep.subr.mxu0 0.0
        %856 = vmatpush1.msra.mxu0 0.0
        %857 = vmatprep.subr.mxu0 0.0
        %858 = vmatpush1.msra.mxu0 0.0
        %859 = vmatprep.subr.mxu0 0.0
        %860 = vmatpush1.msra.mxu0 0.0
        %861 = vmatprep.subr.mxu0 0.0
        %862 = vmatpush1.msra.mxu0 0.0
        %863 = vmatprep.subr.mxu0 0.0
        %864 = vmatpush1.msra.mxu0 0.0
        %865 = vmatprep.subr.mxu0 0.0
        %866 = vmatpush1.msra.mxu0 0.0
        %867 = vmatprep.mubr.f32.mxu0 0.0
        %868 = vmatmul.mubr.f32.gmra.mrb[0].mxu0 %v388
        %v869 = vpop.f32.mrb[0].mxu0
        %v870 = vadd.f32 %v799, %v869
        %v871 = vpop.f32.mrb[0].mxu0
        %v872 = vadd.f32 %v801, %v871
        %873 = vdwg.mxu0
        %874 = vst [vmem:[%s187] sm:$0xff] %v870
        %875 = vst [vmem:[%s187 + $0x8] sm:$0xff] %v872
        %s876 = sand.u32 %s89, 1
        %s877 = scalar_lea.sflag [#allocation4], %s876
        %s878 = sand.u32 %s89, 1
        %s879 = smul.addr %s878, 16
        %s880 = scalar_lea.vmem [#allocation7], %s879
        // Predicated region
        $region37: #{tpu_custom_call.1} parent=27 // pred_check
          %p881 = pneg %p99
        $region38: #{tpu_custom_call.1} parent=27 // pred_check_branch
          %883 = sbr.rel (%p881) target = $region40
        $region39: #{tpu_custom_call.1} parent=27 // pred_region
          %s884 = smul.u32 2, %s25
          %s886 = ssub.s32 256, 256
          %887 = vsyncadd %s877, %s886
          %s888 = smul.addr %s24, 4
          %s889 = sadd.s32 %s884, %s888
          %s890 = smul.addr %s889, 128
          %s891 = scalar_lea.hbm %s2, %s890
          %s893 = sshll.u32 %s880, 4
          %s894 = int_to_ptr.vmem [resolvable:$true] %s893
          %896 = dma.vmem_to_hbm [thread:$0]  %s894, 256, %s891, %s877
        $region40: #{tpu_custom_call.1} parent=27 // pred_fallthru
          _
      $region28: #{tpu_custom_call.1} parent=5 // pred_fallthru
        _
      %p897 = scmp.le.s32.totalorder 2, %s15
      // Predicated region
      $region41: #{tpu_custom_call.1} parent=5 // pred_check
        %p898 = pneg %p897
      $region42: #{tpu_custom_call.1} parent=5 // pred_check_branch
        %900 = sbr.rel (%p898) target = $region44
      $region43: #{tpu_custom_call.1} parent=5 // pred_region
        %s901 = ssub.s32 %s15, 2
        // Predicated region
        $region45: #{tpu_custom_call.1} parent=43 // pred_check
          %p902 = pneg %p105
        $region46: #{tpu_custom_call.1} parent=43 // pred_check_branch
          %904 = sbr.rel (%p902) target = $region48
        $region47: #{tpu_custom_call.1} parent=43 // pred_region
          %s905 = sand.u32 %s90, 1
          %s906 = scalar_lea.sflag [#allocation4], %s905
          %s907 = sand.u32 %s90, 1
          %s908 = smul.addr %s907, 16
          %s909 = scalar_lea.vmem [#allocation7], %s908
          %910 = dma.done %s906, 256
        $region48: #{tpu_custom_call.1} parent=43 // pred_fallthru
          _
      $region44: #{tpu_custom_call.1} parent=5 // pred_fallthru
        _
    $region6: #{tpu_custom_call.1} parent=1 // loop_footer
      %s19 = sadd.s32 1, %s15
    $region7: #{tpu_custom_call.1} parent=1 // loop_footer_branch
      %14 = sbr.rel target = $region3
    $region8: #{tpu_custom_call.1} parent=1 // loop_exit
      _
    %911 = vsyncpa [#allocation3], 1
    %s912 = scalar_lea.sflag [#allocation3], 1
    %913 = vsyncpa %s912, 1
    %914 = vsyncpa [#allocation4], 1
    %s915 = scalar_lea.sflag [#allocation4], 1
    %916 = vsyncpa %s915, 1
    %917 = vsyncpa [#allocation5], 1
    %s918 = scalar_lea.sflag [#allocation5], 1
    %919 = vsyncpa %s918, 1

</llo_original>
